<compile_context>
chip_gen: v6e
topology: v6e:2x2x1
jax: 0.10.0
libtpu: 0.0.40
codegen_flags: <defaults>
</compile_context>

<pallas_src>
import jax
import jax.numpy as jnp
from jax import lax
from jax.experimental import pallas as pl
from jax.experimental.pallas import tpu as pltpu


def _lstm_seq_kernel(x_ref, mask_ref, wx_ref, wh_ref, b_ref, h0_ref, c0_ref,
                     hseq_ref, h_ref, c_ref):
    """One grid step == Tt LSTM timesteps.  h_ref / c_ref (constant index_map)
    stay resident in VMEM across the whole time grid and act as the carry."""
    blk = pl.program_id(0)

    # Initialize the carried state from hx/cx on the first grid step only.
    @pl.when(blk == 0)
    def _():
        h_ref[...] = h0_ref[...]
        c_ref[...] = c0_ref[...]

    H = h_ref.shape[-1]
    Tt = x_ref.shape[0]

    wx = wx_ref[...]          # [A, 4H] bf16, resident
    wh = wh_ref[...]          # [H, 4H] bf16, resident
    b = b_ref[...]            # [1, 4H] f32, gate order (i, f, o, g)

    def step(tt, carry):
        h, c = carry                              # f32 [B, H]
        x = x_ref[tt]                             # [B, A] bf16 (cast in wrapper)

        # Two small MXU dots (no concat), f32 accumulate.
        gates = (jnp.dot(x, wx, preferred_element_type=jnp.float32)
                 + jnp.dot(h.astype(jnp.bfloat16), wh,
                           preferred_element_type=jnp.float32)
                 + b)                              # [B, 4H] f32

        # sigmoid over the contiguous (i, f, o) block, tanh only over g.
        sig = jax.nn.sigmoid(gates[:, :3 * H])
        i_g = sig[:, 0 * H:1 * H]
        f_g = sig[:, 1 * H:2 * H]
        o_g = sig[:, 2 * H:3 * H]
        g_g = jnp.tanh(gates[:, 3 * H:4 * H])

        c_new = f_g * c + i_g * g_g
        h_new = o_g * jnp.tanh(c_new)

        # mask: 1.0 => NO_OP => keep previous state (broadcast over feature dim).
        keep = mask_ref[tt] > 0.5                 # [B, 1]
        h_upd = jnp.where(keep, h, h_new)
        c_upd = jnp.where(keep, c, c_new)

        # Stage per-step h into the (Tt, B, H) output block; the HBM writeback
        # happens once per grid step (lane/sublane-dense slab).
        hseq_ref[tt] = h_upd
        return (h_upd, c_upd)

    h_fin, c_fin = lax.fori_loop(0, Tt, step, (h_ref[...], c_ref[...]),
                                 unroll=True)
    h_ref[...] = h_fin                            # recurrent carry (VMEM-resident)
    c_ref[...] = c_fin


def prepare_lstm_params(w_ih, w_hh, b_ih, b_hh):
    """One-time parameter prep (hoisted out of the recurrent call):
    transpose, reorder gate blocks (i,f,g,o) -> (i,f,o,g), fuse biases,
    cast the matmul weights to bf16 (MXU operands only)."""
    def reorder(m):                               # [..., 4H] blocks i,f,g,o -> i,f,o,g
        i, f, g, o = jnp.split(m, 4, axis=-1)
        return jnp.concatenate([i, f, o, g], axis=-1)

    wx = reorder(jnp.asarray(w_ih, jnp.float32).T).astype(jnp.bfloat16)  # [A, 4H]
    wh = reorder(jnp.asarray(w_hh, jnp.float32).T).astype(jnp.bfloat16)  # [H, 4H]
    b = reorder((jnp.asarray(b_ih, jnp.float32)
                 + jnp.asarray(b_hh, jnp.float32)).reshape(1, -1))        # [1, 4H]
    return wx, wh, b


def _pick_time_block(T, cap=32):
    """Largest divisor of T that is <= cap (keeps the in-kernel unroll modest)."""
    for tt in range(min(T, cap), 0, -1):
        if T % tt == 0:
            return tt
    return 1


def history_encoder_sequence(x_seq, mask_seq, h0, c0, wx, wh, b_fused,
                             time_block=None):
    """Run T HistoryEncoder.forward steps in one fused Pallas kernel.

    x_seq:    [T, B, action_dim]   (prev_action at each step)
    mask_seq: [T, B, 1] bool       (True == NO_OP)
    h0, c0:   [B, state_dim] f32   (set_hiddenx initial state)
    wx, wh:   [A, 4H] / [H, 4H] bf16 (from prepare_lstm_params, gate order i,f,o,g)
    b_fused:  [1, 4H] f32
    returns (h_seq [T, B, H] f32, h_final [B, H] f32, c_final [B, H] f32)
    """
    T, B, A = x_seq.shape
    H = h0.shape[-1]
    Tt = time_block if time_block is not None else _pick_time_block(T)
    assert T % Tt == 0, "time_block must divide T"
    n_blk = T // Tt

    grid_spec = pltpu.PrefetchScalarGridSpec(
        num_scalar_prefetch=0,
        grid=(n_blk,),
        in_specs=[
            pl.BlockSpec((Tt, B, A), lambda g: (g, 0, 0)),     # x slab, pipelined
            pl.BlockSpec((Tt, B, 1), lambda g: (g, 0, 0)),     # mask slab, pipelined
            pl.BlockSpec((A, 4 * H), lambda g: (0, 0)),        # W_x: resident
            pl.BlockSpec((H, 4 * H), lambda g: (0, 0)),        # W_h: resident
            pl.BlockSpec((1, 4 * H), lambda g: (0, 0)),        # bias: resident
            pl.BlockSpec((B, H), lambda g: (0, 0)),            # h0:  resident
            pl.BlockSpec((B, H), lambda g: (0, 0)),            # c0:  resident
        ],
        out_specs=[
            pl.BlockSpec((Tt, B, H), lambda g: (g, 0, 0)),     # h per timestep (slab)
            pl.BlockSpec((B, H), lambda g: (0, 0)),            # final h (carry)
            pl.BlockSpec((B, H), lambda g: (0, 0)),            # final c (carry)
        ],
    )

    h_seq, h_fin, c_fin = pl.pallas_call(
        _lstm_seq_kernel,
        out_shape=(jax.ShapeDtypeStruct((T, B, H), jnp.float32),
                   jax.ShapeDtypeStruct((B, H), jnp.float32),
                   jax.ShapeDtypeStruct((B, H), jnp.float32)),
        grid_spec=grid_spec,
        compiler_params=pltpu.CompilerParams(
            # Recurrence over time -> sequential grid axis.
            dimension_semantics=("arbitrary",)),
    )(x_seq.astype(jnp.bfloat16),                 # bf16 MXU operand, halves DMA bytes
      mask_seq.astype(jnp.float32),
      wx, wh, b_fused,
      h0.astype(jnp.float32), c0.astype(jnp.float32))
    return h_seq, h_fin, c_fin


def _reference_sequence(x_seq, mask_seq, h0, c0, w_ih, w_hh, b_ih, b_hh):
    """Pure-JAX f32 reference mirroring torch.nn.LSTMCell + masking over a sequence."""
    H = h0.shape[-1]

    def step(carry, inp):
        h, c = carry
        x, m = inp
        gates = x @ w_ih.T + b_ih + h @ w_hh.T + b_hh
        i = jax.nn.sigmoid(gates[:, 0 * H:1 * H])
        f = jax.nn.sigmoid(gates[:, 1 * H:2 * H])
        g = jnp.tanh(gates[:, 2 * H:3 * H])
        o = jax.nn.sigmoid(gates[:, 3 * H:4 * H])
        c_new = f * c + i * g
        h_new = o * jnp.tanh(c_new)
        h_out = jnp.where(m, h, h_new)
        c_out = jnp.where(m, c, c_new)
        return (h_out, c_out), h_out

    (h_fin, c_fin), h_seq = jax.lax.scan(step, (h0, c0), (x_seq, mask_seq))
    return h_seq, h_fin, c_fin


if __name__ == "__main__":
    # Small config consistent with the module: action_dim, state_dim, short seq.
    batch = 8
    action_dim = 16
    state_dim = 32
    seq_len = 8

    key = jax.random.PRNGKey(0)
    k1, k2, k3, k4, k5 = jax.random.split(key, 5)

    # Deterministic parameter init (PyTorch uses U(-1/sqrt(H), 1/sqrt(H))).
    bound = 1.0 / (state_dim ** 0.5)
    w_ih = jax.random.uniform(k1, (4 * state_dim, action_dim),
                              minval=-bound, maxval=bound, dtype=jnp.float32)
    w_hh = jax.random.uniform(k2, (4 * state_dim, state_dim),
                              minval=-bound, maxval=bound, dtype=jnp.float32)
    b_ih = jax.random.uniform(k3, (4 * state_dim,),
                              minval=-bound, maxval=bound, dtype=jnp.float32)
    b_hh = jax.random.uniform(k4, (4 * state_dim,),
                              minval=-bound, maxval=bound, dtype=jnp.float32)

    # One-time parameter prep (hoisted out of the recurrent call).
    wx, wh, b_fused = prepare_lstm_params(w_ih, w_hh, b_ih, b_hh)

    # Inputs: prev_action sequence, zero-initialized hx/cx (set_hiddenx), masks.
    x_seq = jax.random.normal(k5, (seq_len, batch, action_dim), dtype=jnp.float32)
    h0 = jnp.zeros((batch, state_dim), jnp.float32)
    c0 = jnp.zeros((batch, state_dim), jnp.float32)
    # Deterministic NO_OP pattern varying over time and batch.
    t_idx = jnp.arange(seq_len).reshape(seq_len, 1, 1)
    b_idx = jnp.arange(batch).reshape(1, batch, 1)
    mask_seq = ((t_idx + b_idx) % 3 == 0)                     # [T, B, 1] bool

    h_seq, h_fin, c_fin = history_encoder_sequence(
        x_seq, mask_seq, h0, c0, wx, wh, b_fused)
    jax.block_until_ready((h_seq, h_fin, c_fin))

    h_seq_ref, h_fin_ref, c_fin_ref = _reference_sequence(
        x_seq, mask_seq, h0, c0, w_ih, w_hh, b_ih, b_hh)

    # bf16 MXU operands vs exact-f32 reference -> slightly looser tolerance.
    assert jnp.allclose(h_seq, h_seq_ref, atol=2e-2, rtol=2e-2)
    assert jnp.allclose(h_fin, h_fin_ref, atol=2e-2, rtol=2e-2)
    assert jnp.allclose(c_fin, c_fin_ref, atol=2e-2, rtol=2e-2)

    print("KERNEL_OK")
</pallas_src>

<mosaic_0001>
module attributes {stable_mosaic.version = 11 : i64} {
  func.func @_lstm_seq_kernel(%arg0: i32, %arg1: memref<8x8x16xbf16, #tpu.memory_space<vmem>>, %arg2: memref<8x8x1xf32, #tpu.memory_space<vmem>>, %arg3: memref<16x128xbf16, #tpu.memory_space<vmem>>, %arg4: memref<32x128xbf16, #tpu.memory_space<vmem>>, %arg5: memref<1x128xf32, #tpu.memory_space<vmem>>, %arg6: memref<8x32xf32, #tpu.memory_space<vmem>>, %arg7: memref<8x32xf32, #tpu.memory_space<vmem>>, %arg8: memref<8x8x32xf32, #tpu.memory_space<vmem>>, %arg9: memref<8x32xf32, #tpu.memory_space<vmem>>, %arg10: memref<8x32xf32, #tpu.memory_space<vmem>>) attributes {dimension_semantics = [#tpu.dimension_semantics<arbitrary>], iteration_bounds = array<i64: 1>, scalar_prefetch = 0 : i64, scratch_operands = 0 : i64, tpu.core_type = #tpu.core_type<tc>, window_params = [{transform_indices = @transform_0, window_bounds = array<i64: 8, 8, 16>}, {transform_indices = @transform_1, window_bounds = array<i64: 8, 8, 1>}, {pipeline_mode = #tpu.pipeline_mode<synchronous>, transform_indices = @transform_2, window_bounds = array<i64: 16, 128>}, {pipeline_mode = #tpu.pipeline_mode<synchronous>, transform_indices = @transform_3, window_bounds = array<i64: 32, 128>}, {pipeline_mode = #tpu.pipeline_mode<synchronous>, transform_indices = @transform_4, window_bounds = array<i64: 1, 128>}, {pipeline_mode = #tpu.pipeline_mode<synchronous>, transform_indices = @transform_5, window_bounds = array<i64: 8, 32>}, {pipeline_mode = #tpu.pipeline_mode<synchronous>, transform_indices = @transform_6, window_bounds = array<i64: 8, 32>}, {transform_indices = @transform_7, window_bounds = array<i64: 8, 8, 32>}, {pipeline_mode = #tpu.pipeline_mode<synchronous>, transform_indices = @transform_8, window_bounds = array<i64: 8, 32>}, {pipeline_mode = #tpu.pipeline_mode<synchronous>, transform_indices = @transform_9, window_bounds = array<i64: 8, 32>}]} {
    %c0_i32 = arith.constant 0 : i32
    %0 = arith.cmpi eq, %arg0, %c0_i32 : i32
    %1 = arith.extui %0 : i1 to i32
    %c0_i32_0 = arith.constant 0 : i32
    %2 = arith.cmpi ne, %1, %c0_i32_0 : i32
    scf.if %2 {
      %c0_94 = arith.constant 0 : index
      %c0_95 = arith.constant 0 : index
      %330 = vector.load %arg6[%c0_94, %c0_95] : memref<8x32xf32, #tpu.memory_space<vmem>>, vector<8x32xf32>
      %c0_96 = arith.constant 0 : index
      %c0_97 = arith.constant 0 : index
      %331 = vector.load %arg9[%c0_96, %c0_97] : memref<8x32xf32, #tpu.memory_space<vmem>>, vector<8x32xf32>
      tpu.vector_store %arg9[%c0_96, %c0_97], %330 {strides = array<i32>} : memref<8x32xf32, #tpu.memory_space<vmem>>, vector<8x32xf32>,
      %c0_98 = arith.constant 0 : index
      %c0_99 = arith.constant 0 : index
      %332 = vector.load %arg7[%c0_98, %c0_99] : memref<8x32xf32, #tpu.memory_space<vmem>>, vector<8x32xf32>
      %c0_100 = arith.constant 0 : index
      %c0_101 = arith.constant 0 : index
      %333 = vector.load %arg10[%c0_100, %c0_101] : memref<8x32xf32, #tpu.memory_space<vmem>>, vector<8x32xf32>
      tpu.vector_store %arg10[%c0_100, %c0_101], %332 {strides = array<i32>} : memref<8x32xf32, #tpu.memory_space<vmem>>, vector<8x32xf32>,
    } else {
    }
    %c0 = arith.constant 0 : index
    %c0_1 = arith.constant 0 : index
    %3 = vector.load %arg3[%c0, %c0_1] : memref<16x128xbf16, #tpu.memory_space<vmem>>, vector<16x128xbf16>
    %c0_2 = arith.constant 0 : index
    %c0_3 = arith.constant 0 : index
    %4 = vector.load %arg4[%c0_2, %c0_3] : memref<32x128xbf16, #tpu.memory_space<vmem>>, vector<32x128xbf16>
    %c0_4 = arith.constant 0 : index
    %c0_5 = arith.constant 0 : index
    %5 = vector.load %arg5[%c0_4, %c0_5] : memref<1x128xf32, #tpu.memory_space<vmem>>, vector<1x128xf32>
    %c0_6 = arith.constant 0 : index
    %c0_7 = arith.constant 0 : index
    %6 = vector.load %arg9[%c0_6, %c0_7] : memref<8x32xf32, #tpu.memory_space<vmem>>, vector<8x32xf32>
    %c0_8 = arith.constant 0 : index
    %c0_9 = arith.constant 0 : index
    %7 = vector.load %arg10[%c0_8, %c0_9] : memref<8x32xf32, #tpu.memory_space<vmem>>, vector<8x32xf32>
    %c0_i32_10 = arith.constant 0 : i32
    %8 = arith.index_cast %c0_i32_10 : i32 to index
    %c0_11 = arith.constant 0 : index
    %c0_12 = arith.constant 0 : index
    %9 = vector.load %arg1[%8, %c0_11, %c0_12] : memref<8x8x16xbf16, #tpu.memory_space<vmem>>, vector<1x8x16xbf16>
    %10 = vector.shape_cast %9 : vector<1x8x16xbf16> to vector<8x16xbf16>
    %cst = arith.constant dense<0.000000e+00> : vector<8x128xf32>
    %11 = tpu.matmul %10, %3, %cst {dimension_numbers = #tpu.dot_dimension_numbers<[1], [0], [0], [1], [0, 0, 1, 1], [], []>} : vector<8x16xbf16>, vector<16x128xbf16>, vector<8x128xf32> -> vector<8x128xf32>
    %12 = arith.truncf %6 : vector<8x32xf32> to vector<8x32xbf16>
    %cst_13 = arith.constant dense<0.000000e+00> : vector<8x128xf32>
    %13 = tpu.matmul %12, %4, %cst_13 {dimension_numbers = #tpu.dot_dimension_numbers<[1], [0], [0], [1], [0, 0, 1, 1], [], []>} : vector<8x32xbf16>, vector<32x128xbf16>, vector<8x128xf32> -> vector<8x128xf32>
    %14 = arith.addf %11, %13 : vector<8x128xf32>
    %15 = vector.broadcast %5 : vector<1x128xf32> to vector<8x128xf32>
    %16 = arith.addf %14, %15 : vector<8x128xf32>
    %17 = vector.extract_strided_slice %16 {offsets = [0, 0], sizes = [8, 96], strides = [1, 1]} : vector<8x128xf32> to vector<8x96xf32>
    %18 = arith.negf %17 : vector<8x96xf32>
    %19 = math.exp %18 : vector<8x96xf32>
    %cst_14 = arith.constant 1.000000e+00 : f32
    %20 = vector.broadcast %cst_14 : f32 to vector<8x96xf32>
    %21 = arith.addf %20, %19 : vector<8x96xf32>
    %22 = arith.divf %20, %21 : vector<8x96xf32>
    %23 = vector.extract_strided_slice %22 {offsets = [0, 0], sizes = [8, 32], strides = [1, 1]} : vector<8x96xf32> to vector<8x32xf32>
    %24 = vector.extract_strided_slice %22 {offsets = [0, 32], sizes = [8, 32], strides = [1, 1]} : vector<8x96xf32> to vector<8x32xf32>
    %25 = vector.extract_strided_slice %22 {offsets = [0, 64], sizes = [8, 32], strides = [1, 1]} : vector<8x96xf32> to vector<8x32xf32>
    %26 = vector.extract_strided_slice %16 {offsets = [0, 96], sizes = [8, 32], strides = [1, 1]} : vector<8x128xf32> to vector<8x32xf32>
    %27 = math.tanh %26 : vector<8x32xf32>
    %28 = arith.mulf %24, %7 : vector<8x32xf32>
    %29 = arith.mulf %23, %27 : vector<8x32xf32>
    %30 = arith.addf %28, %29 : vector<8x32xf32>
    %31 = math.tanh %30 : vector<8x32xf32>
    %32 = arith.mulf %25, %31 : vector<8x32xf32>
    %33 = arith.index_cast %c0_i32_10 : i32 to index
    %c0_15 = arith.constant 0 : index
    %c0_16 = arith.constant 0 : index
    %34 = vector.load %arg2[%33, %c0_15, %c0_16] : memref<8x8x1xf32, #tpu.memory_space<vmem>>, vector<1x8x1xf32>
    %35 = vector.shape_cast %34 : vector<1x8x1xf32> to vector<8x1xf32>
    %cst_17 = arith.constant 5.000000e-01 : f32
    %36 = vector.broadcast %cst_17 : f32 to vector<8x1xf32>
    %37 = arith.cmpf ogt, %35, %36 : vector<8x1xf32>
    %38 = vector.shape_cast %37 : vector<8x1xi1> to vector<8x1xi1>
    %39 = vector.broadcast %38 : vector<8x1xi1> to vector<8x32xi1>
    %40 = arith.select %39, %6, %32 : vector<8x32xi1>, vector<8x32xf32>
    %41 = vector.shape_cast %37 : vector<8x1xi1> to vector<8x1xi1>
    %42 = vector.broadcast %41 : vector<8x1xi1> to vector<8x32xi1>
    %43 = arith.select %42, %7, %30 : vector<8x32xi1>, vector<8x32xf32>
    %44 = arith.index_cast %c0_i32_10 : i32 to index
    %c0_18 = arith.constant 0 : index
    %c0_19 = arith.constant 0 : index
    %45 = vector.load %arg8[%44, %c0_18, %c0_19] : memref<8x8x32xf32, #tpu.memory_space<vmem>>, vector<1x8x32xf32>
    %46 = vector.shape_cast %45 : vector<1x8x32xf32> to vector<8x32xf32>
    %47 = vector.shape_cast %40 : vector<8x32xf32> to vector<1x8x32xf32>
    tpu.vector_store %arg8[%44, %c0_18, %c0_19], %47 {strides = array<i32>} : memref<8x8x32xf32, #tpu.memory_space<vmem>>, vector<1x8x32xf32>,
    %c1_i32 = arith.constant 1 : i32
    %48 = arith.index_cast %c1_i32 : i32 to index
    %c0_20 = arith.constant 0 : index
    %c0_21 = arith.constant 0 : index
    %49 = vector.load %arg1[%48, %c0_20, %c0_21] : memref<8x8x16xbf16, #tpu.memory_space<vmem>>, vector<1x8x16xbf16>
    %50 = vector.shape_cast %49 : vector<1x8x16xbf16> to vector<8x16xbf16>
    %cst_22 = arith.constant dense<0.000000e+00> : vector<8x128xf32>
    %51 = tpu.matmul %50, %3, %cst_22 {dimension_numbers = #tpu.dot_dimension_numbers<[1], [0], [0], [1], [0, 0, 1, 1], [], []>} : vector<8x16xbf16>, vector<16x128xbf16>, vector<8x128xf32> -> vector<8x128xf32>
    %52 = arith.truncf %40 : vector<8x32xf32> to vector<8x32xbf16>
    %cst_23 = arith.constant dense<0.000000e+00> : vector<8x128xf32>
    %53 = tpu.matmul %52, %4, %cst_23 {dimension_numbers = #tpu.dot_dimension_numbers<[1], [0], [0], [1], [0, 0, 1, 1], [], []>} : vector<8x32xbf16>, vector<32x128xbf16>, vector<8x128xf32> -> vector<8x128xf32>
    %54 = arith.addf %51, %53 : vector<8x128xf32>
    %55 = vector.broadcast %5 : vector<1x128xf32> to vector<8x128xf32>
    %56 = arith.addf %54, %55 : vector<8x128xf32>
    %57 = vector.extract_strided_slice %56 {offsets = [0, 0], sizes = [8, 96], strides = [1, 1]} : vector<8x128xf32> to vector<8x96xf32>
    %58 = arith.negf %57 : vector<8x96xf32>
    %59 = math.exp %58 : vector<8x96xf32>
    %cst_24 = arith.constant 1.000000e+00 : f32
    %60 = vector.broadcast %cst_24 : f32 to vector<8x96xf32>
    %61 = arith.addf %60, %59 : vector<8x96xf32>
    %62 = arith.divf %60, %61 : vector<8x96xf32>
    %63 = vector.extract_strided_slice %62 {offsets = [0, 0], sizes = [8, 32], strides = [1, 1]} : vector<8x96xf32> to vector<8x32xf32>
    %64 = vector.extract_strided_slice %62 {offsets = [0, 32], sizes = [8, 32], strides = [1, 1]} : vector<8x96xf32> to vector<8x32xf32>
    %65 = vector.extract_strided_slice %62 {offsets = [0, 64], sizes = [8, 32], strides = [1, 1]} : vector<8x96xf32> to vector<8x32xf32>
    %66 = vector.extract_strided_slice %56 {offsets = [0, 96], sizes = [8, 32], strides = [1, 1]} : vector<8x128xf32> to vector<8x32xf32>
    %67 = math.tanh %66 : vector<8x32xf32>
    %68 = arith.mulf %64, %43 : vector<8x32xf32>
    %69 = arith.mulf %63, %67 : vector<8x32xf32>
    %70 = arith.addf %68, %69 : vector<8x32xf32>
    %71 = math.tanh %70 : vector<8x32xf32>
    %72 = arith.mulf %65, %71 : vector<8x32xf32>
    %73 = arith.index_cast %c1_i32 : i32 to index
    %c0_25 = arith.constant 0 : index
    %c0_26 = arith.constant 0 : index
    %74 = vector.load %arg2[%73, %c0_25, %c0_26] : memref<8x8x1xf32, #tpu.memory_space<vmem>>, vector<1x8x1xf32>
    %75 = vector.shape_cast %74 : vector<1x8x1xf32> to vector<8x1xf32>
    %cst_27 = arith.constant 5.000000e-01 : f32
    %76 = vector.broadcast %cst_27 : f32 to vector<8x1xf32>
    %77 = arith.cmpf ogt, %75, %76 : vector<8x1xf32>
    %78 = vector.shape_cast %77 : vector<8x1xi1> to vector<8x1xi1>
    %79 = vector.broadcast %78 : vector<8x1xi1> to vector<8x32xi1>
    %80 = arith.select %79, %40, %72 : vector<8x32xi1>, vector<8x32xf32>
    %81 = vector.shape_cast %77 : vector<8x1xi1> to vector<8x1xi1>
    %82 = vector.broadcast %81 : vector<8x1xi1> to vector<8x32xi1>
    %83 = arith.select %82, %43, %70 : vector<8x32xi1>, vector<8x32xf32>
    %84 = arith.index_cast %c1_i32 : i32 to index
    %c0_28 = arith.constant 0 : index
    %c0_29 = arith.constant 0 : index
    %85 = vector.load %arg8[%84, %c0_28, %c0_29] : memref<8x8x32xf32, #tpu.memory_space<vmem>>, vector<1x8x32xf32>
    %86 = vector.shape_cast %85 : vector<1x8x32xf32> to vector<8x32xf32>
    %87 = vector.shape_cast %80 : vector<8x32xf32> to vector<1x8x32xf32>
    tpu.vector_store %arg8[%84, %c0_28, %c0_29], %87 {strides = array<i32>} : memref<8x8x32xf32, #tpu.memory_space<vmem>>, vector<1x8x32xf32>,
    %c2_i32 = arith.constant 2 : i32
    %88 = arith.index_cast %c2_i32 : i32 to index
    %c0_30 = arith.constant 0 : index
    %c0_31 = arith.constant 0 : index
    %89 = vector.load %arg1[%88, %c0_30, %c0_31] : memref<8x8x16xbf16, #tpu.memory_space<vmem>>, vector<1x8x16xbf16>
    %90 = vector.shape_cast %89 : vector<1x8x16xbf16> to vector<8x16xbf16>
    %cst_32 = arith.constant dense<0.000000e+00> : vector<8x128xf32>
    %91 = tpu.matmul %90, %3, %cst_32 {dimension_numbers = #tpu.dot_dimension_numbers<[1], [0], [0], [1], [0, 0, 1, 1], [], []>} : vector<8x16xbf16>, vector<16x128xbf16>, vector<8x128xf32> -> vector<8x128xf32>
    %92 = arith.truncf %80 : vector<8x32xf32> to vector<8x32xbf16>
    %cst_33 = arith.constant dense<0.000000e+00> : vector<8x128xf32>
    %93 = tpu.matmul %92, %4, %cst_33 {dimension_numbers = #tpu.dot_dimension_numbers<[1], [0], [0], [1], [0, 0, 1, 1], [], []>} : vector<8x32xbf16>, vector<32x128xbf16>, vector<8x128xf32> -> vector<8x128xf32>
    %94 = arith.addf %91, %93 : vector<8x128xf32>
    %95 = vector.broadcast %5 : vector<1x128xf32> to vector<8x128xf32>
    %96 = arith.addf %94, %95 : vector<8x128xf32>
    %97 = vector.extract_strided_slice %96 {offsets = [0, 0], sizes = [8, 96], strides = [1, 1]} : vector<8x128xf32> to vector<8x96xf32>
    %98 = arith.negf %97 : vector<8x96xf32>
    %99 = math.exp %98 : vector<8x96xf32>
    %cst_34 = arith.constant 1.000000e+00 : f32
    %100 = vector.broadcast %cst_34 : f32 to vector<8x96xf32>
    %101 = arith.addf %100, %99 : vector<8x96xf32>
    %102 = arith.divf %100, %101 : vector<8x96xf32>
    %103 = vector.extract_strided_slice %102 {offsets = [0, 0], sizes = [8, 32], strides = [1, 1]} : vector<8x96xf32> to vector<8x32xf32>
    %104 = vector.extract_strided_slice %102 {offsets = [0, 32], sizes = [8, 32], strides = [1, 1]} : vector<8x96xf32> to vector<8x32xf32>
    %105 = vector.extract_strided_slice %102 {offsets = [0, 64], sizes = [8, 32], strides = [1, 1]} : vector<8x96xf32> to vector<8x32xf32>
    %106 = vector.extract_strided_slice %96 {offsets = [0, 96], sizes = [8, 32], strides = [1, 1]} : vector<8x128xf32> to vector<8x32xf32>
    %107 = math.tanh %106 : vector<8x32xf32>
    %108 = arith.mulf %104, %83 : vector<8x32xf32>
    %109 = arith.mulf %103, %107 : vector<8x32xf32>
    %110 = arith.addf %108, %109 : vector<8x32xf32>
    %111 = math.tanh %110 : vector<8x32xf32>
    %112 = arith.mulf %105, %111 : vector<8x32xf32>
    %113 = arith.index_cast %c2_i32 : i32 to index
    %c0_35 = arith.constant 0 : index
    %c0_36 = arith.constant 0 : index
    %114 = vector.load %arg2[%113, %c0_35, %c0_36] : memref<8x8x1xf32, #tpu.memory_space<vmem>>, vector<1x8x1xf32>
    %115 = vector.shape_cast %114 : vector<1x8x1xf32> to vector<8x1xf32>
    %cst_37 = arith.constant 5.000000e-01 : f32
    %116 = vector.broadcast %cst_37 : f32 to vector<8x1xf32>
    %117 = arith.cmpf ogt, %115, %116 : vector<8x1xf32>
    %118 = vector.shape_cast %117 : vector<8x1xi1> to vector<8x1xi1>
    %119 = vector.broadcast %118 : vector<8x1xi1> to vector<8x32xi1>
    %120 = arith.select %119, %80, %112 : vector<8x32xi1>, vector<8x32xf32>
    %121 = vector.shape_cast %117 : vector<8x1xi1> to vector<8x1xi1>
    %122 = vector.broadcast %121 : vector<8x1xi1> to vector<8x32xi1>
    %123 = arith.select %122, %83, %110 : vector<8x32xi1>, vector<8x32xf32>
    %124 = arith.index_cast %c2_i32 : i32 to index
    %c0_38 = arith.constant 0 : index
    %c0_39 = arith.constant 0 : index
    %125 = vector.load %arg8[%124, %c0_38, %c0_39] : memref<8x8x32xf32, #tpu.memory_space<vmem>>, vector<1x8x32xf32>
    %126 = vector.shape_cast %125 : vector<1x8x32xf32> to vector<8x32xf32>
    %127 = vector.shape_cast %120 : vector<8x32xf32> to vector<1x8x32xf32>
    tpu.vector_store %arg8[%124, %c0_38, %c0_39], %127 {strides = array<i32>} : memref<8x8x32xf32, #tpu.memory_space<vmem>>, vector<1x8x32xf32>,
    %c3_i32 = arith.constant 3 : i32
    %128 = arith.index_cast %c3_i32 : i32 to index
    %c0_40 = arith.constant 0 : index
    %c0_41 = arith.constant 0 : index
    %129 = vector.load %arg1[%128, %c0_40, %c0_41] : memref<8x8x16xbf16, #tpu.memory_space<vmem>>, vector<1x8x16xbf16>
    %130 = vector.shape_cast %129 : vector<1x8x16xbf16> to vector<8x16xbf16>
    %cst_42 = arith.constant dense<0.000000e+00> : vector<8x128xf32>
    %131 = tpu.matmul %130, %3, %cst_42 {dimension_numbers = #tpu.dot_dimension_numbers<[1], [0], [0], [1], [0, 0, 1, 1], [], []>} : vector<8x16xbf16>, vector<16x128xbf16>, vector<8x128xf32> -> vector<8x128xf32>
    %132 = arith.truncf %120 : vector<8x32xf32> to vector<8x32xbf16>
    %cst_43 = arith.constant dense<0.000000e+00> : vector<8x128xf32>
    %133 = tpu.matmul %132, %4, %cst_43 {dimension_numbers = #tpu.dot_dimension_numbers<[1], [0], [0], [1], [0, 0, 1, 1], [], []>} : vector<8x32xbf16>, vector<32x128xbf16>, vector<8x128xf32> -> vector<8x128xf32>
    %134 = arith.addf %131, %133 : vector<8x128xf32>
    %135 = vector.broadcast %5 : vector<1x128xf32> to vector<8x128xf32>
    %136 = arith.addf %134, %135 : vector<8x128xf32>
    %137 = vector.extract_strided_slice %136 {offsets = [0, 0], sizes = [8, 96], strides = [1, 1]} : vector<8x128xf32> to vector<8x96xf32>
    %138 = arith.negf %137 : vector<8x96xf32>
    %139 = math.exp %138 : vector<8x96xf32>
    %cst_44 = arith.constant 1.000000e+00 : f32
    %140 = vector.broadcast %cst_44 : f32 to vector<8x96xf32>
    %141 = arith.addf %140, %139 : vector<8x96xf32>
    %142 = arith.divf %140, %141 : vector<8x96xf32>
    %143 = vector.extract_strided_slice %142 {offsets = [0, 0], sizes = [8, 32], strides = [1, 1]} : vector<8x96xf32> to vector<8x32xf32>
    %144 = vector.extract_strided_slice %142 {offsets = [0, 32], sizes = [8, 32], strides = [1, 1]} : vector<8x96xf32> to vector<8x32xf32>
    %145 = vector.extract_strided_slice %142 {offsets = [0, 64], sizes = [8, 32], strides = [1, 1]} : vector<8x96xf32> to vector<8x32xf32>
    %146 = vector.extract_strided_slice %136 {offsets = [0, 96], sizes = [8, 32], strides = [1, 1]} : vector<8x128xf32> to vector<8x32xf32>
    %147 = math.tanh %146 : vector<8x32xf32>
    %148 = arith.mulf %144, %123 : vector<8x32xf32>
    %149 = arith.mulf %143, %147 : vector<8x32xf32>
    %150 = arith.addf %148, %149 : vector<8x32xf32>
    %151 = math.tanh %150 : vector<8x32xf32>
    %152 = arith.mulf %145, %151 : vector<8x32xf32>
    %153 = arith.index_cast %c3_i32 : i32 to index
    %c0_45 = arith.constant 0 : index
    %c0_46 = arith.constant 0 : index
    %154 = vector.load %arg2[%153, %c0_45, %c0_46] : memref<8x8x1xf32, #tpu.memory_space<vmem>>, vector<1x8x1xf32>
    %155 = vector.shape_cast %154 : vector<1x8x1xf32> to vector<8x1xf32>
    %cst_47 = arith.constant 5.000000e-01 : f32
    %156 = vector.broadcast %cst_47 : f32 to vector<8x1xf32>
    %157 = arith.cmpf ogt, %155, %156 : vector<8x1xf32>
    %158 = vector.shape_cast %157 : vector<8x1xi1> to vector<8x1xi1>
    %159 = vector.broadcast %158 : vector<8x1xi1> to vector<8x32xi1>
    %160 = arith.select %159, %120, %152 : vector<8x32xi1>, vector<8x32xf32>
    %161 = vector.shape_cast %157 : vector<8x1xi1> to vector<8x1xi1>
    %162 = vector.broadcast %161 : vector<8x1xi1> to vector<8x32xi1>
    %163 = arith.select %162, %123, %150 : vector<8x32xi1>, vector<8x32xf32>
    %164 = arith.index_cast %c3_i32 : i32 to index
    %c0_48 = arith.constant 0 : index
    %c0_49 = arith.constant 0 : index
    %165 = vector.load %arg8[%164, %c0_48, %c0_49] : memref<8x8x32xf32, #tpu.memory_space<vmem>>, vector<1x8x32xf32>
    %166 = vector.shape_cast %165 : vector<1x8x32xf32> to vector<8x32xf32>
    %167 = vector.shape_cast %160 : vector<8x32xf32> to vector<1x8x32xf32>
    tpu.vector_store %arg8[%164, %c0_48, %c0_49], %167 {strides = array<i32>} : memref<8x8x32xf32, #tpu.memory_space<vmem>>, vector<1x8x32xf32>,
    %c4_i32 = arith.constant 4 : i32
    %168 = arith.index_cast %c4_i32 : i32 to index
    %c0_50 = arith.constant 0 : index
    %c0_51 = arith.constant 0 : index
    %169 = vector.load %arg1[%168, %c0_50, %c0_51] : memref<8x8x16xbf16, #tpu.memory_space<vmem>>, vector<1x8x16xbf16>
    %170 = vector.shape_cast %169 : vector<1x8x16xbf16> to vector<8x16xbf16>
    %cst_52 = arith.constant dense<0.000000e+00> : vector<8x128xf32>
    %171 = tpu.matmul %170, %3, %cst_52 {dimension_numbers = #tpu.dot_dimension_numbers<[1], [0], [0], [1], [0, 0, 1, 1], [], []>} : vector<8x16xbf16>, vector<16x128xbf16>, vector<8x128xf32> -> vector<8x128xf32>
    %172 = arith.truncf %160 : vector<8x32xf32> to vector<8x32xbf16>
    %cst_53 = arith.constant dense<0.000000e+00> : vector<8x128xf32>
    %173 = tpu.matmul %172, %4, %cst_53 {dimension_numbers = #tpu.dot_dimension_numbers<[1], [0], [0], [1], [0, 0, 1, 1], [], []>} : vector<8x32xbf16>, vector<32x128xbf16>, vector<8x128xf32> -> vector<8x128xf32>
    %174 = arith.addf %171, %173 : vector<8x128xf32>
    %175 = vector.broadcast %5 : vector<1x128xf32> to vector<8x128xf32>
    %176 = arith.addf %174, %175 : vector<8x128xf32>
    %177 = vector.extract_strided_slice %176 {offsets = [0, 0], sizes = [8, 96], strides = [1, 1]} : vector<8x128xf32> to vector<8x96xf32>
    %178 = arith.negf %177 : vector<8x96xf32>
    %179 = math.exp %178 : vector<8x96xf32>
    %cst_54 = arith.constant 1.000000e+00 : f32
    %180 = vector.broadcast %cst_54 : f32 to vector<8x96xf32>
    %181 = arith.addf %180, %179 : vector<8x96xf32>
    %182 = arith.divf %180, %181 : vector<8x96xf32>
    %183 = vector.extract_strided_slice %182 {offsets = [0, 0], sizes = [8, 32], strides = [1, 1]} : vector<8x96xf32> to vector<8x32xf32>
    %184 = vector.extract_strided_slice %182 {offsets = [0, 32], sizes = [8, 32], strides = [1, 1]} : vector<8x96xf32> to vector<8x32xf32>
    %185 = vector.extract_strided_slice %182 {offsets = [0, 64], sizes = [8, 32], strides = [1, 1]} : vector<8x96xf32> to vector<8x32xf32>
    %186 = vector.extract_strided_slice %176 {offsets = [0, 96], sizes = [8, 32], strides = [1, 1]} : vector<8x128xf32> to vector<8x32xf32>
    %187 = math.tanh %186 : vector<8x32xf32>
    %188 = arith.mulf %184, %163 : vector<8x32xf32>
    %189 = arith.mulf %183, %187 : vector<8x32xf32>
    %190 = arith.addf %188, %189 : vector<8x32xf32>
    %191 = math.tanh %190 : vector<8x32xf32>
    %192 = arith.mulf %185, %191 : vector<8x32xf32>
    %193 = arith.index_cast %c4_i32 : i32 to index
    %c0_55 = arith.constant 0 : index
    %c0_56 = arith.constant 0 : index
    %194 = vector.load %arg2[%193, %c0_55, %c0_56] : memref<8x8x1xf32, #tpu.memory_space<vmem>>, vector<1x8x1xf32>
    %195 = vector.shape_cast %194 : vector<1x8x1xf32> to vector<8x1xf32>
    %cst_57 = arith.constant 5.000000e-01 : f32
    %196 = vector.broadcast %cst_57 : f32 to vector<8x1xf32>
    %197 = arith.cmpf ogt, %195, %196 : vector<8x1xf32>
    %198 = vector.shape_cast %197 : vector<8x1xi1> to vector<8x1xi1>
    %199 = vector.broadcast %198 : vector<8x1xi1> to vector<8x32xi1>
    %200 = arith.select %199, %160, %192 : vector<8x32xi1>, vector<8x32xf32>
    %201 = vector.shape_cast %197 : vector<8x1xi1> to vector<8x1xi1>
    %202 = vector.broadcast %201 : vector<8x1xi1> to vector<8x32xi1>
    %203 = arith.select %202, %163, %190 : vector<8x32xi1>, vector<8x32xf32>
    %204 = arith.index_cast %c4_i32 : i32 to index
    %c0_58 = arith.constant 0 : index
    %c0_59 = arith.constant 0 : index
    %205 = vector.load %arg8[%204, %c0_58, %c0_59] : memref<8x8x32xf32, #tpu.memory_space<vmem>>, vector<1x8x32xf32>
    %206 = vector.shape_cast %205 : vector<1x8x32xf32> to vector<8x32xf32>
    %207 = vector.shape_cast %200 : vector<8x32xf32> to vector<1x8x32xf32>
    tpu.vector_store %arg8[%204, %c0_58, %c0_59], %207 {strides = array<i32>} : memref<8x8x32xf32, #tpu.memory_space<vmem>>, vector<1x8x32xf32>,
    %c5_i32 = arith.constant 5 : i32
    %208 = arith.index_cast %c5_i32 : i32 to index
    %c0_60 = arith.constant 0 : index
    %c0_61 = arith.constant 0 : index
    %209 = vector.load %arg1[%208, %c0_60, %c0_61] : memref<8x8x16xbf16, #tpu.memory_space<vmem>>, vector<1x8x16xbf16>
    %210 = vector.shape_cast %209 : vector<1x8x16xbf16> to vector<8x16xbf16>
    %cst_62 = arith.constant dense<0.000000e+00> : vector<8x128xf32>
    %211 = tpu.matmul %210, %3, %cst_62 {dimension_numbers = #tpu.dot_dimension_numbers<[1], [0], [0], [1], [0, 0, 1, 1], [], []>} : vector<8x16xbf16>, vector<16x128xbf16>, vector<8x128xf32> -> vector<8x128xf32>
    %212 = arith.truncf %200 : vector<8x32xf32> to vector<8x32xbf16>
    %cst_63 = arith.constant dense<0.000000e+00> : vector<8x128xf32>
    %213 = tpu.matmul %212, %4, %cst_63 {dimension_numbers = #tpu.dot_dimension_numbers<[1], [0], [0], [1], [0, 0, 1, 1], [], []>} : vector<8x32xbf16>, vector<32x128xbf16>, vector<8x128xf32> -> vector<8x128xf32>
    %214 = arith.addf %211, %213 : vector<8x128xf32>
    %215 = vector.broadcast %5 : vector<1x128xf32> to vector<8x128xf32>
    %216 = arith.addf %214, %215 : vector<8x128xf32>
    %217 = vector.extract_strided_slice %216 {offsets = [0, 0], sizes = [8, 96], strides = [1, 1]} : vector<8x128xf32> to vector<8x96xf32>
    %218 = arith.negf %217 : vector<8x96xf32>
    %219 = math.exp %218 : vector<8x96xf32>
    %cst_64 = arith.constant 1.000000e+00 : f32
    %220 = vector.broadcast %cst_64 : f32 to vector<8x96xf32>
    %221 = arith.addf %220, %219 : vector<8x96xf32>
    %222 = arith.divf %220, %221 : vector<8x96xf32>
    %223 = vector.extract_strided_slice %222 {offsets = [0, 0], sizes = [8, 32], strides = [1, 1]} : vector<8x96xf32> to vector<8x32xf32>
    %224 = vector.extract_strided_slice %222 {offsets = [0, 32], sizes = [8, 32], strides = [1, 1]} : vector<8x96xf32> to vector<8x32xf32>
    %225 = vector.extract_strided_slice %222 {offsets = [0, 64], sizes = [8, 32], strides = [1, 1]} : vector<8x96xf32> to vector<8x32xf32>
    %226 = vector.extract_strided_slice %216 {offsets = [0, 96], sizes = [8, 32], strides = [1, 1]} : vector<8x128xf32> to vector<8x32xf32>
    %227 = math.tanh %226 : vector<8x32xf32>
    %228 = arith.mulf %224, %203 : vector<8x32xf32>
    %229 = arith.mulf %223, %227 : vector<8x32xf32>
    %230 = arith.addf %228, %229 : vector<8x32xf32>
    %231 = math.tanh %230 : vector<8x32xf32>
    %232 = arith.mulf %225, %231 : vector<8x32xf32>
    %233 = arith.index_cast %c5_i32 : i32 to index
    %c0_65 = arith.constant 0 : index
    %c0_66 = arith.constant 0 : index
    %234 = vector.load %arg2[%233, %c0_65, %c0_66] : memref<8x8x1xf32, #tpu.memory_space<vmem>>, vector<1x8x1xf32>
    %235 = vector.shape_cast %234 : vector<1x8x1xf32> to vector<8x1xf32>
    %cst_67 = arith.constant 5.000000e-01 : f32
    %236 = vector.broadcast %cst_67 : f32 to vector<8x1xf32>
    %237 = arith.cmpf ogt, %235, %236 : vector<8x1xf32>
    %238 = vector.shape_cast %237 : vector<8x1xi1> to vector<8x1xi1>
    %239 = vector.broadcast %238 : vector<8x1xi1> to vector<8x32xi1>
    %240 = arith.select %239, %200, %232 : vector<8x32xi1>, vector<8x32xf32>
    %241 = vector.shape_cast %237 : vector<8x1xi1> to vector<8x1xi1>
    %242 = vector.broadcast %241 : vector<8x1xi1> to vector<8x32xi1>
    %243 = arith.select %242, %203, %230 : vector<8x32xi1>, vector<8x32xf32>
    %244 = arith.index_cast %c5_i32 : i32 to index
    %c0_68 = arith.constant 0 : index
    %c0_69 = arith.constant 0 : index
    %245 = vector.load %arg8[%244, %c0_68, %c0_69] : memref<8x8x32xf32, #tpu.memory_space<vmem>>, vector<1x8x32xf32>
    %246 = vector.shape_cast %245 : vector<1x8x32xf32> to vector<8x32xf32>
    %247 = vector.shape_cast %240 : vector<8x32xf32> to vector<1x8x32xf32>
    tpu.vector_store %arg8[%244, %c0_68, %c0_69], %247 {strides = array<i32>} : memref<8x8x32xf32, #tpu.memory_space<vmem>>, vector<1x8x32xf32>,
    %c6_i32 = arith.constant 6 : i32
    %248 = arith.index_cast %c6_i32 : i32 to index
    %c0_70 = arith.constant 0 : index
    %c0_71 = arith.constant 0 : index
    %249 = vector.load %arg1[%248, %c0_70, %c0_71] : memref<8x8x16xbf16, #tpu.memory_space<vmem>>, vector<1x8x16xbf16>
    %250 = vector.shape_cast %249 : vector<1x8x16xbf16> to vector<8x16xbf16>
    %cst_72 = arith.constant dense<0.000000e+00> : vector<8x128xf32>
    %251 = tpu.matmul %250, %3, %cst_72 {dimension_numbers = #tpu.dot_dimension_numbers<[1], [0], [0], [1], [0, 0, 1, 1], [], []>} : vector<8x16xbf16>, vector<16x128xbf16>, vector<8x128xf32> -> vector<8x128xf32>
    %252 = arith.truncf %240 : vector<8x32xf32> to vector<8x32xbf16>
    %cst_73 = arith.constant dense<0.000000e+00> : vector<8x128xf32>
    %253 = tpu.matmul %252, %4, %cst_73 {dimension_numbers = #tpu.dot_dimension_numbers<[1], [0], [0], [1], [0, 0, 1, 1], [], []>} : vector<8x32xbf16>, vector<32x128xbf16>, vector<8x128xf32> -> vector<8x128xf32>
    %254 = arith.addf %251, %253 : vector<8x128xf32>
    %255 = vector.broadcast %5 : vector<1x128xf32> to vector<8x128xf32>
    %256 = arith.addf %254, %255 : vector<8x128xf32>
    %257 = vector.extract_strided_slice %256 {offsets = [0, 0], sizes = [8, 96], strides = [1, 1]} : vector<8x128xf32> to vector<8x96xf32>
    %258 = arith.negf %257 : vector<8x96xf32>
    %259 = math.exp %258 : vector<8x96xf32>
    %cst_74 = arith.constant 1.000000e+00 : f32
    %260 = vector.broadcast %cst_74 : f32 to vector<8x96xf32>
    %261 = arith.addf %260, %259 : vector<8x96xf32>
    %262 = arith.divf %260, %261 : vector<8x96xf32>
    %263 = vector.extract_strided_slice %262 {offsets = [0, 0], sizes = [8, 32], strides = [1, 1]} : vector<8x96xf32> to vector<8x32xf32>
    %264 = vector.extract_strided_slice %262 {offsets = [0, 32], sizes = [8, 32], strides = [1, 1]} : vector<8x96xf32> to vector<8x32xf32>
    %265 = vector.extract_strided_slice %262 {offsets = [0, 64], sizes = [8, 32], strides = [1, 1]} : vector<8x96xf32> to vector<8x32xf32>
    %266 = vector.extract_strided_slice %256 {offsets = [0, 96], sizes = [8, 32], strides = [1, 1]} : vector<8x128xf32> to vector<8x32xf32>
    %267 = math.tanh %266 : vector<8x32xf32>
    %268 = arith.mulf %264, %243 : vector<8x32xf32>
    %269 = arith.mulf %263, %267 : vector<8x32xf32>
    %270 = arith.addf %268, %269 : vector<8x32xf32>
    %271 = math.tanh %270 : vector<8x32xf32>
    %272 = arith.mulf %265, %271 : vector<8x32xf32>
    %273 = arith.index_cast %c6_i32 : i32 to index
    %c0_75 = arith.constant 0 : index
    %c0_76 = arith.constant 0 : index
    %274 = vector.load %arg2[%273, %c0_75, %c0_76] : memref<8x8x1xf32, #tpu.memory_space<vmem>>, vector<1x8x1xf32>
    %275 = vector.shape_cast %274 : vector<1x8x1xf32> to vector<8x1xf32>
    %cst_77 = arith.constant 5.000000e-01 : f32
    %276 = vector.broadcast %cst_77 : f32 to vector<8x1xf32>
    %277 = arith.cmpf ogt, %275, %276 : vector<8x1xf32>
    %278 = vector.shape_cast %277 : vector<8x1xi1> to vector<8x1xi1>
    %279 = vector.broadcast %278 : vector<8x1xi1> to vector<8x32xi1>
    %280 = arith.select %279, %240, %272 : vector<8x32xi1>, vector<8x32xf32>
    %281 = vector.shape_cast %277 : vector<8x1xi1> to vector<8x1xi1>
    %282 = vector.broadcast %281 : vector<8x1xi1> to vector<8x32xi1>
    %283 = arith.select %282, %243, %270 : vector<8x32xi1>, vector<8x32xf32>
    %284 = arith.index_cast %c6_i32 : i32 to index
    %c0_78 = arith.constant 0 : index
    %c0_79 = arith.constant 0 : index
    %285 = vector.load %arg8[%284, %c0_78, %c0_79] : memref<8x8x32xf32, #tpu.memory_space<vmem>>, vector<1x8x32xf32>
    %286 = vector.shape_cast %285 : vector<1x8x32xf32> to vector<8x32xf32>
    %287 = vector.shape_cast %280 : vector<8x32xf32> to vector<1x8x32xf32>
    tpu.vector_store %arg8[%284, %c0_78, %c0_79], %287 {strides = array<i32>} : memref<8x8x32xf32, #tpu.memory_space<vmem>>, vector<1x8x32xf32>,
    %c7_i32 = arith.constant 7 : i32
    %288 = arith.index_cast %c7_i32 : i32 to index
    %c0_80 = arith.constant 0 : index
    %c0_81 = arith.constant 0 : index
    %289 = vector.load %arg1[%288, %c0_80, %c0_81] : memref<8x8x16xbf16, #tpu.memory_space<vmem>>, vector<1x8x16xbf16>
    %290 = vector.shape_cast %289 : vector<1x8x16xbf16> to vector<8x16xbf16>
    %cst_82 = arith.constant dense<0.000000e+00> : vector<8x128xf32>
    %291 = tpu.matmul %290, %3, %cst_82 {dimension_numbers = #tpu.dot_dimension_numbers<[1], [0], [0], [1], [0, 0, 1, 1], [], []>} : vector<8x16xbf16>, vector<16x128xbf16>, vector<8x128xf32> -> vector<8x128xf32>
    %292 = arith.truncf %280 : vector<8x32xf32> to vector<8x32xbf16>
    %cst_83 = arith.constant dense<0.000000e+00> : vector<8x128xf32>
    %293 = tpu.matmul %292, %4, %cst_83 {dimension_numbers = #tpu.dot_dimension_numbers<[1], [0], [0], [1], [0, 0, 1, 1], [], []>} : vector<8x32xbf16>, vector<32x128xbf16>, vector<8x128xf32> -> vector<8x128xf32>
    %294 = arith.addf %291, %293 : vector<8x128xf32>
    %295 = vector.broadcast %5 : vector<1x128xf32> to vector<8x128xf32>
    %296 = arith.addf %294, %295 : vector<8x128xf32>
    %297 = vector.extract_strided_slice %296 {offsets = [0, 0], sizes = [8, 96], strides = [1, 1]} : vector<8x128xf32> to vector<8x96xf32>
    %298 = arith.negf %297 : vector<8x96xf32>
    %299 = math.exp %298 : vector<8x96xf32>
    %cst_84 = arith.constant 1.000000e+00 : f32
    %300 = vector.broadcast %cst_84 : f32 to vector<8x96xf32>
    %301 = arith.addf %300, %299 : vector<8x96xf32>
    %302 = arith.divf %300, %301 : vector<8x96xf32>
    %303 = vector.extract_strided_slice %302 {offsets = [0, 0], sizes = [8, 32], strides = [1, 1]} : vector<8x96xf32> to vector<8x32xf32>
    %304 = vector.extract_strided_slice %302 {offsets = [0, 32], sizes = [8, 32], strides = [1, 1]} : vector<8x96xf32> to vector<8x32xf32>
    %305 = vector.extract_strided_slice %302 {offsets = [0, 64], sizes = [8, 32], strides = [1, 1]} : vector<8x96xf32> to vector<8x32xf32>
    %306 = vector.extract_strided_slice %296 {offsets = [0, 96], sizes = [8, 32], strides = [1, 1]} : vector<8x128xf32> to vector<8x32xf32>
    %307 = math.tanh %306 : vector<8x32xf32>
    %308 = arith.mulf %304, %283 : vector<8x32xf32>
    %309 = arith.mulf %303, %307 : vector<8x32xf32>
    %310 = arith.addf %308, %309 : vector<8x32xf32>
    %311 = math.tanh %310 : vector<8x32xf32>
    %312 = arith.mulf %305, %311 : vector<8x32xf32>
    %313 = arith.index_cast %c7_i32 : i32 to index
    %c0_85 = arith.constant 0 : index
    %c0_86 = arith.constant 0 : index
    %314 = vector.load %arg2[%313, %c0_85, %c0_86] : memref<8x8x1xf32, #tpu.memory_space<vmem>>, vector<1x8x1xf32>
    %315 = vector.shape_cast %314 : vector<1x8x1xf32> to vector<8x1xf32>
    %cst_87 = arith.constant 5.000000e-01 : f32
    %316 = vector.broadcast %cst_87 : f32 to vector<8x1xf32>
    %317 = arith.cmpf ogt, %315, %316 : vector<8x1xf32>
    %318 = vector.shape_cast %317 : vector<8x1xi1> to vector<8x1xi1>
    %319 = vector.broadcast %318 : vector<8x1xi1> to vector<8x32xi1>
    %320 = arith.select %319, %280, %312 : vector<8x32xi1>, vector<8x32xf32>
    %321 = vector.shape_cast %317 : vector<8x1xi1> to vector<8x1xi1>
    %322 = vector.broadcast %321 : vector<8x1xi1> to vector<8x32xi1>
    %323 = arith.select %322, %283, %310 : vector<8x32xi1>, vector<8x32xf32>
    %324 = arith.index_cast %c7_i32 : i32 to index
    %c0_88 = arith.constant 0 : index
    %c0_89 = arith.constant 0 : index
    %325 = vector.load %arg8[%324, %c0_88, %c0_89] : memref<8x8x32xf32, #tpu.memory_space<vmem>>, vector<1x8x32xf32>
    %326 = vector.shape_cast %325 : vector<1x8x32xf32> to vector<8x32xf32>
    %327 = vector.shape_cast %320 : vector<8x32xf32> to vector<1x8x32xf32>
    tpu.vector_store %arg8[%324, %c0_88, %c0_89], %327 {strides = array<i32>} : memref<8x8x32xf32, #tpu.memory_space<vmem>>, vector<1x8x32xf32>,
    %c8_i32 = arith.constant 8 : i32
    %c0_90 = arith.constant 0 : index
    %c0_91 = arith.constant 0 : index
    %328 = vector.load %arg9[%c0_90, %c0_91] : memref<8x32xf32, #tpu.memory_space<vmem>>, vector<8x32xf32>
    tpu.vector_store %arg9[%c0_90, %c0_91], %320 {strides = array<i32>} : memref<8x32xf32, #tpu.memory_space<vmem>>, vector<8x32xf32>,
    %c0_92 = arith.constant 0 : index
    %c0_93 = arith.constant 0 : index
    %329 = vector.load %arg10[%c0_92, %c0_93] : memref<8x32xf32, #tpu.memory_space<vmem>>, vector<8x32xf32>
    tpu.vector_store %arg10[%c0_92, %c0_93], %323 {strides = array<i32>} : memref<8x32xf32, #tpu.memory_space<vmem>>, vector<8x32xf32>,
    return
  }
  func.func @transform_0(%arg0: i32) -> (i32, i32, i32) {
    %c0_i32 = arith.constant 0 : i32
    %c0_i32_0 = arith.constant 0 : i32
    %c0_i32_1 = arith.constant 0 : i32
    return %arg0, %c0_i32, %c0_i32_0 : i32, i32, i32
  }
  func.func @transform_1(%arg0: i32) -> (i32, i32, i32) {
    %c0_i32 = arith.constant 0 : i32
    %c0_i32_0 = arith.constant 0 : i32
    %c0_i32_1 = arith.constant 0 : i32
    return %arg0, %c0_i32, %c0_i32_0 : i32, i32, i32
  }
  func.func @transform_2(%arg0: i32) -> (i32, i32) {
    %c0_i32 = arith.constant 0 : i32
    %c0_i32_0 = arith.constant 0 : i32
    %c0_i32_1 = arith.constant 0 : i32
    return %c0_i32, %c0_i32_0 : i32, i32
  }
  func.func @transform_3(%arg0: i32) -> (i32, i32) {
    %c0_i32 = arith.constant 0 : i32
    %c0_i32_0 = arith.constant 0 : i32
    %c0_i32_1 = arith.constant 0 : i32
    return %c0_i32, %c0_i32_0 : i32, i32
  }
  func.func @transform_4(%arg0: i32) -> (i32, i32) {
    %c0_i32 = arith.constant 0 : i32
    %c0_i32_0 = arith.constant 0 : i32
    %c0_i32_1 = arith.constant 0 : i32
    return %c0_i32, %c0_i32_0 : i32, i32
  }
  func.func @transform_5(%arg0: i32) -> (i32, i32) {
    %c0_i32 = arith.constant 0 : i32
    %c0_i32_0 = arith.constant 0 : i32
    %c0_i32_1 = arith.constant 0 : i32
    return %c0_i32, %c0_i32_0 : i32, i32
  }
  func.func @transform_6(%arg0: i32) -> (i32, i32) {
    %c0_i32 = arith.constant 0 : i32
    %c0_i32_0 = arith.constant 0 : i32
    %c0_i32_1 = arith.constant 0 : i32
    return %c0_i32, %c0_i32_0 : i32, i32
  }
  func.func @transform_7(%arg0: i32) -> (i32, i32, i32) {
    %c0_i32 = arith.constant 0 : i32
    %c0_i32_0 = arith.constant 0 : i32
    %c0_i32_1 = arith.constant 0 : i32
    return %arg0, %c0_i32, %c0_i32_0 : i32, i32, i32
  }
  func.func @transform_8(%arg0: i32) -> (i32, i32) {
    %c0_i32 = arith.constant 0 : i32
    %c0_i32_0 = arith.constant 0 : i32
    %c0_i32_1 = arith.constant 0 : i32
    return %c0_i32, %c0_i32_0 : i32, i32
  }
  func.func @transform_9(%arg0: i32) -> (i32, i32) {
    %c0_i32 = arith.constant 0 : i32
    %c0_i32_0 = arith.constant 0 : i32
    %c0_i32_1 = arith.constant 0 : i32
    return %c0_i32, %c0_i32_0 : i32, i32
  }
}

</mosaic_0001>

<llo_original>
// kernel: tpu_custom_call.1
$region0: #{tpu_custom_call.1}
  #allocation0 [shape = 'u32[]', space=smem, size = 0x4, offset = 0x4, fixed_abs, tag = 'smem constant byte address 0x4 - core index']
  #allocation1 [shape = 'u32[144,128]{1,0:T(1,128)}', space=vmem, size = 0x12000, scoped, tag = 'internal scratch']
  %s0 = inlined_call_operand.vmem [shape: bf16[8,8,16], index: 0, kind: input, shape index: {}]
  %s1 = inlined_call_operand.vmem [shape: f32[8,8,1], index: 1, kind: input, shape index: {}]
  %s2 = inlined_call_operand.vmem [shape: bf16[16,128], index: 2, kind: input, shape index: {}]
  %s3 = inlined_call_operand.vmem [shape: bf16[32,128], index: 3, kind: input, shape index: {}]
  %s4 = inlined_call_operand.vmem [shape: f32[1,128], index: 4, kind: input, shape index: {}]
  %s5 = inlined_call_operand.vmem [shape: f32[8,32], index: 5, kind: input, shape index: {}]
  %s6 = inlined_call_operand.vmem [shape: f32[8,32], index: 6, kind: input, shape index: {}]
  %s7 = inlined_call_operand.hbm [shape: f32[8,8,32], index: 7, kind: output, shape index: {0}]
  %s8 = inlined_call_operand.hbm [shape: f32[8,32], index: 8, kind: output, shape index: {1}]
  %s9 = inlined_call_operand.hbm [shape: f32[8,32], index: 9, kind: output, shape index: {2}]
  %10 = xla_tuple %s7, %s8, %s9
  %s11 = sld [smem:[#allocation0]]
  $region58: #{tpu_custom_call.1} parent=0
    _
  %s13 = ssub.s32 1, %s11
  %s14 = scalar_select 0, %s13, %s11
  $region1: #{tpu_custom_call.1} parent=0
    #allocation2 [shape = 'u8[32768]{0}', space=vmem, size = 0x8000, scoped, tag = 'output window, operand 0, single buffered']
    #allocation3 [shape = 's32[1]{0}', space=sflag, size = 0x4, scoped, tag = 'scoped memory for tpu_custom_call.1']
    #allocation4 [shape = 'u8[4096]{0}', space=vmem, size = 0x1000, scoped, tag = 'output window, operand 1, single buffered']
    #allocation5 [shape = 's32[1]{0}', space=sflag, size = 0x4, scoped, tag = 'scoped memory for tpu_custom_call.1']
    #allocation6 [shape = 'u8[4096]{0}', space=vmem, size = 0x1000, scoped, tag = 'output window, operand 2, single buffered']
    %15 = vsyncpa [#allocation3], 0
    %16 = vsyncpa [#allocation5], 0
    // Predicated region
    $region2: #{tpu_custom_call.1} parent=1 // pred_check
      _
    $region3: #{tpu_custom_call.1} parent=1 // pred_check_branch
      %18 = sbr.rel (0) target = $region5
    $region4: #{tpu_custom_call.1} parent=1 // pred_region
      _
    $region5: #{tpu_custom_call.1} parent=1 // pred_fallthru
      _
    // Predicated region
    $region6: #{tpu_custom_call.1} parent=1 // pred_check
      _
    $region7: #{tpu_custom_call.1} parent=1 // pred_check_branch
      %20 = sbr.rel (0) target = $region9
    $region8: #{tpu_custom_call.1} parent=1 // pred_region
      _
    $region9: #{tpu_custom_call.1} parent=1 // pred_fallthru
      _
    // Predicated region
    $region10: #{tpu_custom_call.1} parent=1 // pred_check
      _
    $region11: #{tpu_custom_call.1} parent=1 // pred_check_branch
      %22 = sbr.rel (0) target = $region13
    $region12: #{tpu_custom_call.1} parent=1 // pred_region
      _
    $region13: #{tpu_custom_call.1} parent=1 // pred_fallthru
      _
    // Predicated region
    $region14: #{tpu_custom_call.1} parent=1 // pred_check
      _
    $region15: #{tpu_custom_call.1} parent=1 // pred_check_branch
      %24 = sbr.rel (0) target = $region17
    $region16: #{tpu_custom_call.1} parent=1 // pred_region
      _
    $region17: #{tpu_custom_call.1} parent=1 // pred_fallthru
      _
    // Predicated region
    $region18: #{tpu_custom_call.1} parent=1 // pred_check
      _
    $region19: #{tpu_custom_call.1} parent=1 // pred_check_branch
      %26 = sbr.rel (0) target = $region21
    $region20: #{tpu_custom_call.1} parent=1 // pred_region
      _
    $region21: #{tpu_custom_call.1} parent=1 // pred_fallthru
      _
    // Predicated region
    $region22: #{tpu_custom_call.1} parent=1 // pred_check
      _
    $region23: #{tpu_custom_call.1} parent=1 // pred_check_branch
      %28 = sbr.rel (0) target = $region25
    $region24: #{tpu_custom_call.1} parent=1 // pred_region
      _
    $region25: #{tpu_custom_call.1} parent=1 // pred_fallthru
      _
    // Predicated region
    $region26: #{tpu_custom_call.1} parent=1 // pred_check
      _
    $region27: #{tpu_custom_call.1} parent=1 // pred_check_branch
      %30 = sbr.rel (0) target = $region29
    $region28: #{tpu_custom_call.1} parent=1 // pred_region
      _
    $region29: #{tpu_custom_call.1} parent=1 // pred_fallthru
      _
    %p32 = scmp.eq.s32.totalorder 0, 0
    // Predicated region
    $region30: #{tpu_custom_call.1} parent=1 // pred_check
      %p33 = pneg %p32
    $region31: #{tpu_custom_call.1} parent=1 // pred_check_branch
      %35 = sbr.rel (%p33) target = $region33
    $region32: #{tpu_custom_call.1} parent=1 // pred_region
      %v36 = vld [vmem:[%s5] sm:$0xff]
      %vm37 = vcmask 261120
      %38 = vst.msk [vmem:[#allocation4] sm:$0xff] %vm37, %v36
      %v39 = vld [vmem:[%s6] sm:$0xff]
      %40 = vst.msk [vmem:[#allocation6] sm:$0xff] %vm37, %v39
    $region33: #{tpu_custom_call.1} parent=1 // pred_fallthru
      _
    %v41 = vld [vmem:[%s2] sm:$0xf]
    %v42 = vld [vmem:[%s2 + $0x4] sm:$0xf]
    %v43 = vld [vmem:[%s3] sm:$0xf]
    %v44 = vld [vmem:[%s3 + $0x4] sm:$0xf]
    %v45 = vld [vmem:[%s3 + $0x8] sm:$0xf]
    %v46 = vld [vmem:[%s3 + $0xc] sm:$0xf]
    %v47 = vld [vmem:[%s4] sm:$0x1]
    %v48 = vld [vmem:[#allocation4] sm:$0xff]
    %v49 = vld [vmem:[#allocation6] sm:$0xff]
    %v50 = vld [vmem:[%s0] sm:$0xf]
    %v51 = vpack.c.bf16 %v48, %v48
    %v56 = vunpack.c.l.b16 %v43
    %v57 = vunpack.c.l.b16 %v44
    %v58 = vunpack.c.l.b16 %v45
    %v59 = vunpack.c.l.b16 %v46
    %v60 = vpack.c.b16 %v57, %v56
    %v61 = vpack.c.b16 %v59, %v58
    %vm64 = vcmask 261120
    %v66 = vsel %vm64, %v51, 0
    %68 = vmatprep.subr.bf16.mxu0 0
    %69 = vmatpush1.bf16.msra.mxu0 0
    %70 = vmatprep.subr.bf16.mxu0 0
    %71 = vmatpush1.bf16.msra.mxu0 0
    %72 = vmatprep.subr.bf16.mxu0 0
    %73 = vmatpush1.bf16.msra.mxu0 0
    %74 = vmatprep.subr.bf16.mxu0 0
    %75 = vmatpush1.bf16.msra.mxu0 0
    %76 = vmatprep.subr.bf16.mxu0 0
    %77 = vmatpush1.bf16.msra.mxu0 0
    %78 = vmatprep.subr.bf16.mxu0 0
    %79 = vmatpush1.bf16.msra.mxu0 0
    %80 = vmatprep.subr.bf16.mxu0 0
    %81 = vmatpush1.bf16.msra.mxu0 %v61
    %82 = vmatprep.subr.bf16.mxu0 0
    %83 = vmatpush1.bf16.msra.mxu0 %v60
    %84 = vmatprep.subr.bf16.mxu0 0
    %85 = vmatpush2.bf16.msra.mxu0 0
    %86 = vmatprep.subr.bf16.mxu0 0
    %87 = vmatpush2.bf16.msra.mxu0 0
    %88 = vmatprep.subr.bf16.mxu0 0
    %89 = vmatpush2.bf16.msra.mxu0 0
    %90 = vmatprep.subr.bf16.mxu0 0
    %91 = vmatpush2.bf16.msra.mxu0 0
    %92 = vmatprep.subr.bf16.mxu0 0
    %93 = vmatpush2.bf16.msra.mxu0 0
    %94 = vmatprep.subr.bf16.mxu0 0
    %95 = vmatpush2.bf16.msra.mxu0 0
    %96 = vmatprep.subr.bf16.mxu0 0
    %97 = vmatpush2.bf16.msra.mxu0 0
    %98 = vmatprep.subr.bf16.mxu0 0
    %99 = vmatpush2.bf16.msra.mxu0 0
    %100 = vmatprep.mubr.bf16.mxu0 0
    %101 = vmatmul.mubr.bf16.gmra.mxu0 %v66
    %v102 = vpop.f32.mrf.mxu0
    %v103 = vadd.f32 0.0, %v102
    %v104 = vpop.f32.mrf.mxu0
    %v105 = vpop.f32.mrf.mxu0
    %v106 = vpop.f32.mrf.mxu0
    %107 = vdwg.mxu0
    %v110 = vunpack.c.l.b16 %v41
    %v111 = vunpack.c.l.b16 %v42
    %v112 = vpack.c.b16 %v111, %v110
    %vm114 = vcmask 130048
    %v116 = vsel %vm114, %v50, 0
    %118 = vmatprep.subr.bf16.mxu0 0
    %119 = vmatpush1.bf16.msra.mxu0 0
    %120 = vmatprep.subr.bf16.mxu0 0
    %121 = vmatpush1.bf16.msra.mxu0 0
    %122 = vmatprep.subr.bf16.mxu0 0
    %123 = vmatpush1.bf16.msra.mxu0 0
    %124 = vmatprep.subr.bf16.mxu0 0
    %125 = vmatpush1.bf16.msra.mxu0 0
    %126 = vmatprep.subr.bf16.mxu0 0
    %127 = vmatpush1.bf16.msra.mxu0 0
    %128 = vmatprep.subr.bf16.mxu0 0
    %129 = vmatpush1.bf16.msra.mxu0 0
    %130 = vmatprep.subr.bf16.mxu0 0
    %131 = vmatpush1.bf16.msra.mxu0 0
    %132 = vmatprep.subr.bf16.mxu0 0
    %133 = vmatpush1.bf16.msra.mxu0 %v112
    %134 = vmatprep.subr.bf16.mxu0 0
    %135 = vmatpush2.bf16.msra.mxu0 0
    %136 = vmatprep.subr.bf16.mxu0 0
    %137 = vmatpush2.bf16.msra.mxu0 0
    %138 = vmatprep.subr.bf16.mxu0 0
    %139 = vmatpush2.bf16.msra.mxu0 0
    %140 = vmatprep.subr.bf16.mxu0 0
    %141 = vmatpush2.bf16.msra.mxu0 0
    %142 = vmatprep.subr.bf16.mxu0 0
    %143 = vmatpush2.bf16.msra.mxu0 0
    %144 = vmatprep.subr.bf16.mxu0 0
    %145 = vmatpush2.bf16.msra.mxu0 0
    %146 = vmatprep.subr.bf16.mxu0 0
    %147 = vmatpush2.bf16.msra.mxu0 0
    %148 = vmatprep.subr.bf16.mxu0 0
    %149 = vmatpush2.bf16.msra.mxu0 0
    %150 = vmatprep.mubr.bf16.mxu0 0
    %151 = vmatmul.mubr.bf16.gmra.mxu0 %v116
    %v152 = vpop.f32.mrf.mxu0
    %v153 = vadd.f32 %v103, %v152
    %v154 = vpop.f32.mrf.mxu0
    %v155 = vpop.f32.mrf.mxu0
    %v156 = vpop.f32.mrf.mxu0
    %157 = vdwg.mxu0
    %v159 = vlaneseq
    %v160 = vshrl.u32 %v159, 7
    %v161 = vsub.s32 0, %v160
    %v162 = vrot.slane %v47, %v161
    %v164 = vadd.f32 %v153, %v162
    %v165 = vxor.u32 %v164, 2147483648
    %v166 = vmul.f32 %v165, 1.442695
    %v167 = vpow.pop %v166
    %v168 = vadd.f32 %v167, 1.0
    %v169 = vrcp.pop %v168
    %v170 = vmul.f32 1.0, %v169
    %v171 = vtanh.pop %v164
    %173 = vrot.lane.b32.xlu0 %v49, 32
    %v174 = vpop.permute.xlu0 %173
    %v176 = vmul.f32 %v170, %v174
    %178 = vrot.lane.b32.xlu0 %v171, 32
    %v179 = vpop.permute.xlu0 %178
    %v181 = vmul.f32 %v170, %v179
    %183 = vrot.lane.b32.xlu0 %v181, 32
    %v184 = vpop.permute.xlu0 %183
    %v186 = vadd.f32 %v176, %v184
    %v187 = vtanh.pop %v186
    %189 = vrot.lane.b32.xlu0 %v187, 32
    %v190 = vpop.permute.xlu0 %189
    %v192 = vmul.f32 %v170, %v190
    %v193 = vld [vmem:[%s1] sm:$0xff]
    %vm194 = vcmp.gt.f32.partialorder %v193, 0.5
    %v195 = vsel %vm194, 1, 0
    %196 = vset.pattern.permute.xlu0 0
    %197 = vperm.xlu0 %196, %v195
    %v198 = vpop.permute.xlu0 %197
    %vm199 = vcmp.eq.s32.totalorder %v198, 1
    %201 = vrot.lane.b32.xlu0 %v192, 64
    %v202 = vpop.permute.xlu0 %201
    %v204 = vsel %vm199, %v48, %v202
    %206 = vrot.lane.b32.xlu0 %v186, 96
    %v207 = vpop.permute.xlu0 %206
    %v209 = vsel %vm199, %v49, %v207
    %210 = vst.msk [vmem:[#allocation2] sm:$0xff] %vm64, %v204
    %s211 = scalar_lea.vmem %s0, 4
    %v212 = vld [vmem:[%s211] sm:$0xf]
    %v213 = vpack.c.bf16 %v204, %v204
    %v215 = vsel %vm64, %v213, 0
    %217 = vmatprep.subr.bf16.mxu0 0
    %218 = vmatpush1.bf16.msra.mxu0 0
    %219 = vmatprep.subr.bf16.mxu0 0
    %220 = vmatpush1.bf16.msra.mxu0 0
    %221 = vmatprep.subr.bf16.mxu0 0
    %222 = vmatpush1.bf16.msra.mxu0 0
    %223 = vmatprep.subr.bf16.mxu0 0
    %224 = vmatpush1.bf16.msra.mxu0 0
    %225 = vmatprep.subr.bf16.mxu0 0
    %226 = vmatpush1.bf16.msra.mxu0 0
    %227 = vmatprep.subr.bf16.mxu0 0
    %228 = vmatpush1.bf16.msra.mxu0 0
    %229 = vmatprep.subr.bf16.mxu0 0
    %230 = vmatpush1.bf16.msra.mxu0 %v61
    %231 = vmatprep.subr.bf16.mxu0 0
    %232 = vmatpush1.bf16.msra.mxu0 %v60
    %233 = vmatprep.subr.bf16.mxu0 0
    %234 = vmatpush2.bf16.msra.mxu0 0
    %235 = vmatprep.subr.bf16.mxu0 0
    %236 = vmatpush2.bf16.msra.mxu0 0
    %237 = vmatprep.subr.bf16.mxu0 0
    %238 = vmatpush2.bf16.msra.mxu0 0
    %239 = vmatprep.subr.bf16.mxu0 0
    %240 = vmatpush2.bf16.msra.mxu0 0
    %241 = vmatprep.subr.bf16.mxu0 0
    %242 = vmatpush2.bf16.msra.mxu0 0
    %243 = vmatprep.subr.bf16.mxu0 0
    %244 = vmatpush2.bf16.msra.mxu0 0
    %245 = vmatprep.subr.bf16.mxu0 0
    %246 = vmatpush2.bf16.msra.mxu0 0
    %247 = vmatprep.subr.bf16.mxu0 0
    %248 = vmatpush2.bf16.msra.mxu0 0
    %249 = vmatprep.mubr.bf16.mxu0 0
    %250 = vmatmul.mubr.bf16.gmra.mxu0 %v215
    %v251 = vpop.f32.mrf.mxu0
    %v252 = vadd.f32 0.0, %v251
    %v253 = vpop.f32.mrf.mxu0
    %v254 = vpop.f32.mrf.mxu0
    %v255 = vpop.f32.mrf.mxu0
    %256 = vdwg.mxu0
    %v258 = vsel %vm114, %v212, 0
    %260 = vmatprep.subr.bf16.mxu0 0
    %261 = vmatpush1.bf16.msra.mxu0 0
    %262 = vmatprep.subr.bf16.mxu0 0
    %263 = vmatpush1.bf16.msra.mxu0 0
    %264 = vmatprep.subr.bf16.mxu0 0
    %265 = vmatpush1.bf16.msra.mxu0 0
    %266 = vmatprep.subr.bf16.mxu0 0
    %267 = vmatpush1.bf16.msra.mxu0 0
    %268 = vmatprep.subr.bf16.mxu0 0
    %269 = vmatpush1.bf16.msra.mxu0 0
    %270 = vmatprep.subr.bf16.mxu0 0
    %271 = vmatpush1.bf16.msra.mxu0 0
    %272 = vmatprep.subr.bf16.mxu0 0
    %273 = vmatpush1.bf16.msra.mxu0 0
    %274 = vmatprep.subr.bf16.mxu0 0
    %275 = vmatpush1.bf16.msra.mxu0 %v112
    %276 = vmatprep.subr.bf16.mxu0 0
    %277 = vmatpush2.bf16.msra.mxu0 0
    %278 = vmatprep.subr.bf16.mxu0 0
    %279 = vmatpush2.bf16.msra.mxu0 0
    %280 = vmatprep.subr.bf16.mxu0 0
    %281 = vmatpush2.bf16.msra.mxu0 0
    %282 = vmatprep.subr.bf16.mxu0 0
    %283 = vmatpush2.bf16.msra.mxu0 0
    %284 = vmatprep.subr.bf16.mxu0 0
    %285 = vmatpush2.bf16.msra.mxu0 0
    %286 = vmatprep.subr.bf16.mxu0 0
    %287 = vmatpush2.bf16.msra.mxu0 0
    %288 = vmatprep.subr.bf16.mxu0 0
    %289 = vmatpush2.bf16.msra.mxu0 0
    %290 = vmatprep.subr.bf16.mxu0 0
    %291 = vmatpush2.bf16.msra.mxu0 0
    %292 = vmatprep.mubr.bf16.mxu0 0
    %293 = vmatmul.mubr.bf16.gmra.mxu0 %v258
    %v294 = vpop.f32.mrf.mxu0
    %v295 = vadd.f32 %v252, %v294
    %v296 = vpop.f32.mrf.mxu0
    %v297 = vpop.f32.mrf.mxu0
    %v298 = vpop.f32.mrf.mxu0
    %299 = vdwg.mxu0
    %v300 = vadd.f32 %v295, %v162
    %v301 = vxor.u32 %v300, 2147483648
    %v302 = vmul.f32 %v301, 1.442695
    %v303 = vpow.pop %v302
    %v304 = vadd.f32 %v303, 1.0
    %v305 = vrcp.pop %v304
    %v306 = vmul.f32 1.0, %v305
    %v307 = vtanh.pop %v300
    %309 = vrot.lane.b32.xlu0 %v209, 32
    %v310 = vpop.permute.xlu0 %309
    %v312 = vmul.f32 %v306, %v310
    %314 = vrot.lane.b32.xlu0 %v307, 32
    %v315 = vpop.permute.xlu0 %314
    %v317 = vmul.f32 %v306, %v315
    %319 = vrot.lane.b32.xlu0 %v317, 32
    %v320 = vpop.permute.xlu0 %319
    %v322 = vadd.f32 %v312, %v320
    %v323 = vtanh.pop %v322
    %325 = vrot.lane.b32.xlu0 %v323, 32
    %v326 = vpop.permute.xlu0 %325
    %v328 = vmul.f32 %v306, %v326
    %s329 = scalar_lea.vmem %s1, 8
    %v330 = vld [vmem:[%s329] sm:$0xff]
    %vm331 = vcmp.gt.f32.partialorder %v330, 0.5
    %v332 = vsel %vm331, 1, 0
    %333 = vset.pattern.permute.xlu0 0
    %334 = vperm.xlu0 %333, %v332
    %v335 = vpop.permute.xlu0 %334
    %vm336 = vcmp.eq.s32.totalorder %v335, 1
    %338 = vrot.lane.b32.xlu0 %v328, 64
    %v339 = vpop.permute.xlu0 %338
    %v341 = vsel %vm336, %v204, %v339
    %343 = vrot.lane.b32.xlu0 %v322, 96
    %v344 = vpop.permute.xlu0 %343
    %v346 = vsel %vm336, %v209, %v344
    %s347 = scalar_lea.vmem [#allocation2], 8
    %348 = vst.msk [vmem:[%s347] sm:$0xff] %vm64, %v341
    %s349 = scalar_lea.vmem %s0, 8
    %v350 = vld [vmem:[%s349] sm:$0xf]
    %v351 = vpack.c.bf16 %v341, %v341
    %v353 = vsel %vm64, %v351, 0
    %355 = vmatprep.subr.bf16.mxu0 0
    %356 = vmatpush1.bf16.msra.mxu0 0
    %357 = vmatprep.subr.bf16.mxu0 0
    %358 = vmatpush1.bf16.msra.mxu0 0
    %359 = vmatprep.subr.bf16.mxu0 0
    %360 = vmatpush1.bf16.msra.mxu0 0
    %361 = vmatprep.subr.bf16.mxu0 0
    %362 = vmatpush1.bf16.msra.mxu0 0
    %363 = vmatprep.subr.bf16.mxu0 0
    %364 = vmatpush1.bf16.msra.mxu0 0
    %365 = vmatprep.subr.bf16.mxu0 0
    %366 = vmatpush1.bf16.msra.mxu0 0
    %367 = vmatprep.subr.bf16.mxu0 0
    %368 = vmatpush1.bf16.msra.mxu0 %v61
    %369 = vmatprep.subr.bf16.mxu0 0
    %370 = vmatpush1.bf16.msra.mxu0 %v60
    %371 = vmatprep.subr.bf16.mxu0 0
    %372 = vmatpush2.bf16.msra.mxu0 0
    %373 = vmatprep.subr.bf16.mxu0 0
    %374 = vmatpush2.bf16.msra.mxu0 0
    %375 = vmatprep.subr.bf16.mxu0 0
    %376 = vmatpush2.bf16.msra.mxu0 0
    %377 = vmatprep.subr.bf16.mxu0 0
    %378 = vmatpush2.bf16.msra.mxu0 0
    %379 = vmatprep.subr.bf16.mxu0 0
    %380 = vmatpush2.bf16.msra.mxu0 0
    %381 = vmatprep.subr.bf16.mxu0 0
    %382 = vmatpush2.bf16.msra.mxu0 0
    %383 = vmatprep.subr.bf16.mxu0 0
    %384 = vmatpush2.bf16.msra.mxu0 0
    %385 = vmatprep.subr.bf16.mxu0 0
    %386 = vmatpush2.bf16.msra.mxu0 0
    %387 = vmatprep.mubr.bf16.mxu0 0
    %388 = vmatmul.mubr.bf16.gmra.mxu0 %v353
    %v389 = vpop.f32.mrf.mxu0
    %v390 = vadd.f32 0.0, %v389
    %v391 = vpop.f32.mrf.mxu0
    %v392 = vpop.f32.mrf.mxu0
    %v393 = vpop.f32.mrf.mxu0
    %394 = vdwg.mxu0
    %v396 = vsel %vm114, %v350, 0
    %398 = vmatprep.subr.bf16.mxu0 0
    %399 = vmatpush1.bf16.msra.mxu0 0
    %400 = vmatprep.subr.bf16.mxu0 0
    %401 = vmatpush1.bf16.msra.mxu0 0
    %402 = vmatprep.subr.bf16.mxu0 0
    %403 = vmatpush1.bf16.msra.mxu0 0
    %404 = vmatprep.subr.bf16.mxu0 0
    %405 = vmatpush1.bf16.msra.mxu0 0
    %406 = vmatprep.subr.bf16.mxu0 0
    %407 = vmatpush1.bf16.msra.mxu0 0
    %408 = vmatprep.subr.bf16.mxu0 0
    %409 = vmatpush1.bf16.msra.mxu0 0
    %410 = vmatprep.subr.bf16.mxu0 0
    %411 = vmatpush1.bf16.msra.mxu0 0
    %412 = vmatprep.subr.bf16.mxu0 0
    %413 = vmatpush1.bf16.msra.mxu0 %v112
    %414 = vmatprep.subr.bf16.mxu0 0
    %415 = vmatpush2.bf16.msra.mxu0 0
    %416 = vmatprep.subr.bf16.mxu0 0
    %417 = vmatpush2.bf16.msra.mxu0 0
    %418 = vmatprep.subr.bf16.mxu0 0
    %419 = vmatpush2.bf16.msra.mxu0 0
    %420 = vmatprep.subr.bf16.mxu0 0
    %421 = vmatpush2.bf16.msra.mxu0 0
    %422 = vmatprep.subr.bf16.mxu0 0
    %423 = vmatpush2.bf16.msra.mxu0 0
    %424 = vmatprep.subr.bf16.mxu0 0
    %425 = vmatpush2.bf16.msra.mxu0 0
    %426 = vmatprep.subr.bf16.mxu0 0
    %427 = vmatpush2.bf16.msra.mxu0 0
    %428 = vmatprep.subr.bf16.mxu0 0
    %429 = vmatpush2.bf16.msra.mxu0 0
    %430 = vmatprep.mubr.bf16.mxu0 0
    %431 = vmatmul.mubr.bf16.gmra.mxu0 %v396
    %v432 = vpop.f32.mrf.mxu0
    %v433 = vadd.f32 %v390, %v432
    %v434 = vpop.f32.mrf.mxu0
    %v435 = vpop.f32.mrf.mxu0
    %v436 = vpop.f32.mrf.mxu0
    %437 = vdwg.mxu0
    %v438 = vadd.f32 %v433, %v162
    %v439 = vxor.u32 %v438, 2147483648
    %v440 = vmul.f32 %v439, 1.442695
    %v441 = vpow.pop %v440
    %v442 = vadd.f32 %v441, 1.0
    %v443 = vrcp.pop %v442
    %v444 = vmul.f32 1.0, %v443
    %v445 = vtanh.pop %v438
    %447 = vrot.lane.b32.xlu0 %v346, 32
    %v448 = vpop.permute.xlu0 %447
    %v450 = vmul.f32 %v444, %v448
    %452 = vrot.lane.b32.xlu0 %v445, 32
    %v453 = vpop.permute.xlu0 %452
    %v455 = vmul.f32 %v444, %v453
    %457 = vrot.lane.b32.xlu0 %v455, 32
    %v458 = vpop.permute.xlu0 %457
    %v460 = vadd.f32 %v450, %v458
    %v461 = vtanh.pop %v460
    %463 = vrot.lane.b32.xlu0 %v461, 32
    %v464 = vpop.permute.xlu0 %463
    %v466 = vmul.f32 %v444, %v464
    %s467 = scalar_lea.vmem %s1, 16
    %v468 = vld [vmem:[%s467] sm:$0xff]
    %vm469 = vcmp.gt.f32.partialorder %v468, 0.5
    %v470 = vsel %vm469, 1, 0
    %471 = vset.pattern.permute.xlu0 0
    %472 = vperm.xlu0 %471, %v470
    %v473 = vpop.permute.xlu0 %472
    %vm474 = vcmp.eq.s32.totalorder %v473, 1
    %476 = vrot.lane.b32.xlu0 %v466, 64
    %v477 = vpop.permute.xlu0 %476
    %v479 = vsel %vm474, %v341, %v477
    %481 = vrot.lane.b32.xlu0 %v460, 96
    %v482 = vpop.permute.xlu0 %481
    %v484 = vsel %vm474, %v346, %v482
    %s485 = scalar_lea.vmem [#allocation2], 16
    %486 = vst.msk [vmem:[%s485] sm:$0xff] %vm64, %v479
    %s487 = scalar_lea.vmem %s0, 12
    %v488 = vld [vmem:[%s487] sm:$0xf]
    %v489 = vpack.c.bf16 %v479, %v479
    %v491 = vsel %vm64, %v489, 0
    %493 = vmatprep.subr.bf16.mxu0 0
    %494 = vmatpush1.bf16.msra.mxu0 0
    %495 = vmatprep.subr.bf16.mxu0 0
    %496 = vmatpush1.bf16.msra.mxu0 0
    %497 = vmatprep.subr.bf16.mxu0 0
    %498 = vmatpush1.bf16.msra.mxu0 0
    %499 = vmatprep.subr.bf16.mxu0 0
    %500 = vmatpush1.bf16.msra.mxu0 0
    %501 = vmatprep.subr.bf16.mxu0 0
    %502 = vmatpush1.bf16.msra.mxu0 0
    %503 = vmatprep.subr.bf16.mxu0 0
    %504 = vmatpush1.bf16.msra.mxu0 0
    %505 = vmatprep.subr.bf16.mxu0 0
    %506 = vmatpush1.bf16.msra.mxu0 %v61
    %507 = vmatprep.subr.bf16.mxu0 0
    %508 = vmatpush1.bf16.msra.mxu0 %v60
    %509 = vmatprep.subr.bf16.mxu0 0
    %510 = vmatpush2.bf16.msra.mxu0 0
    %511 = vmatprep.subr.bf16.mxu0 0
    %512 = vmatpush2.bf16.msra.mxu0 0
    %513 = vmatprep.subr.bf16.mxu0 0
    %514 = vmatpush2.bf16.msra.mxu0 0
    %515 = vmatprep.subr.bf16.mxu0 0
    %516 = vmatpush2.bf16.msra.mxu0 0
    %517 = vmatprep.subr.bf16.mxu0 0
    %518 = vmatpush2.bf16.msra.mxu0 0
    %519 = vmatprep.subr.bf16.mxu0 0
    %520 = vmatpush2.bf16.msra.mxu0 0
    %521 = vmatprep.subr.bf16.mxu0 0
    %522 = vmatpush2.bf16.msra.mxu0 0
    %523 = vmatprep.subr.bf16.mxu0 0
    %524 = vmatpush2.bf16.msra.mxu0 0
    %525 = vmatprep.mubr.bf16.mxu0 0
    %526 = vmatmul.mubr.bf16.gmra.mxu0 %v491
    %v527 = vpop.f32.mrf.mxu0
    %v528 = vadd.f32 0.0, %v527
    %v529 = vpop.f32.mrf.mxu0
    %v530 = vpop.f32.mrf.mxu0
    %v531 = vpop.f32.mrf.mxu0
    %532 = vdwg.mxu0
    %v534 = vsel %vm114, %v488, 0
    %536 = vmatprep.subr.bf16.mxu0 0
    %537 = vmatpush1.bf16.msra.mxu0 0
    %538 = vmatprep.subr.bf16.mxu0 0
    %539 = vmatpush1.bf16.msra.mxu0 0
    %540 = vmatprep.subr.bf16.mxu0 0
    %541 = vmatpush1.bf16.msra.mxu0 0
    %542 = vmatprep.subr.bf16.mxu0 0
    %543 = vmatpush1.bf16.msra.mxu0 0
    %544 = vmatprep.subr.bf16.mxu0 0
    %545 = vmatpush1.bf16.msra.mxu0 0
    %546 = vmatprep.subr.bf16.mxu0 0
    %547 = vmatpush1.bf16.msra.mxu0 0
    %548 = vmatprep.subr.bf16.mxu0 0
    %549 = vmatpush1.bf16.msra.mxu0 0
    %550 = vmatprep.subr.bf16.mxu0 0
    %551 = vmatpush1.bf16.msra.mxu0 %v112
    %552 = vmatprep.subr.bf16.mxu0 0
    %553 = vmatpush2.bf16.msra.mxu0 0
    %554 = vmatprep.subr.bf16.mxu0 0
    %555 = vmatpush2.bf16.msra.mxu0 0
    %556 = vmatprep.subr.bf16.mxu0 0
    %557 = vmatpush2.bf16.msra.mxu0 0
    %558 = vmatprep.subr.bf16.mxu0 0
    %559 = vmatpush2.bf16.msra.mxu0 0
    %560 = vmatprep.subr.bf16.mxu0 0
    %561 = vmatpush2.bf16.msra.mxu0 0
    %562 = vmatprep.subr.bf16.mxu0 0
    %563 = vmatpush2.bf16.msra.mxu0 0
    %564 = vmatprep.subr.bf16.mxu0 0
    %565 = vmatpush2.bf16.msra.mxu0 0
    %566 = vmatprep.subr.bf16.mxu0 0
    %567 = vmatpush2.bf16.msra.mxu0 0
    %568 = vmatprep.mubr.bf16.mxu0 0
    %569 = vmatmul.mubr.bf16.gmra.mxu0 %v534
    %v570 = vpop.f32.mrf.mxu0
    %v571 = vadd.f32 %v528, %v570
    %v572 = vpop.f32.mrf.mxu0
    %v573 = vpop.f32.mrf.mxu0
    %v574 = vpop.f32.mrf.mxu0
    %575 = vdwg.mxu0
    %v576 = vadd.f32 %v571, %v162
    %v577 = vxor.u32 %v576, 2147483648
    %v578 = vmul.f32 %v577, 1.442695
    %v579 = vpow.pop %v578
    %v580 = vadd.f32 %v579, 1.0
    %v581 = vrcp.pop %v580
    %v582 = vmul.f32 1.0, %v581
    %v583 = vtanh.pop %v576
    %585 = vrot.lane.b32.xlu0 %v484, 32
    %v586 = vpop.permute.xlu0 %585
    %v588 = vmul.f32 %v582, %v586
    %590 = vrot.lane.b32.xlu0 %v583, 32
    %v591 = vpop.permute.xlu0 %590
    %v593 = vmul.f32 %v582, %v591
    %595 = vrot.lane.b32.xlu0 %v593, 32
    %v596 = vpop.permute.xlu0 %595
    %v598 = vadd.f32 %v588, %v596
    %v599 = vtanh.pop %v598
    %601 = vrot.lane.b32.xlu0 %v599, 32
    %v602 = vpop.permute.xlu0 %601
    %v604 = vmul.f32 %v582, %v602
    %s605 = scalar_lea.vmem %s1, 24
    %v606 = vld [vmem:[%s605] sm:$0xff]
    %vm607 = vcmp.gt.f32.partialorder %v606, 0.5
    %v608 = vsel %vm607, 1, 0
    %609 = vset.pattern.permute.xlu0 0
    %610 = vperm.xlu0 %609, %v608
    %v611 = vpop.permute.xlu0 %610
    %vm612 = vcmp.eq.s32.totalorder %v611, 1
    %614 = vrot.lane.b32.xlu0 %v604, 64
    %v615 = vpop.permute.xlu0 %614
    %v617 = vsel %vm612, %v479, %v615
    %619 = vrot.lane.b32.xlu0 %v598, 96
    %v620 = vpop.permute.xlu0 %619
    %v622 = vsel %vm612, %v484, %v620
    %s623 = scalar_lea.vmem [#allocation2], 24
    %624 = vst.msk [vmem:[%s623] sm:$0xff] %vm64, %v617
    %s625 = scalar_lea.vmem %s0, 16
    %v626 = vld [vmem:[%s625] sm:$0xf]
    %v627 = vpack.c.bf16 %v617, %v617
    %v629 = vsel %vm64, %v627, 0
    %631 = vmatprep.subr.bf16.mxu0 0
    %632 = vmatpush1.bf16.msra.mxu0 0
    %633 = vmatprep.subr.bf16.mxu0 0
    %634 = vmatpush1.bf16.msra.mxu0 0
    %635 = vmatprep.subr.bf16.mxu0 0
    %636 = vmatpush1.bf16.msra.mxu0 0
    %637 = vmatprep.subr.bf16.mxu0 0
    %638 = vmatpush1.bf16.msra.mxu0 0
    %639 = vmatprep.subr.bf16.mxu0 0
    %640 = vmatpush1.bf16.msra.mxu0 0
    %641 = vmatprep.subr.bf16.mxu0 0
    %642 = vmatpush1.bf16.msra.mxu0 0
    %643 = vmatprep.subr.bf16.mxu0 0
    %644 = vmatpush1.bf16.msra.mxu0 %v61
    %645 = vmatprep.subr.bf16.mxu0 0
    %646 = vmatpush1.bf16.msra.mxu0 %v60
    %647 = vmatprep.subr.bf16.mxu0 0
    %648 = vmatpush2.bf16.msra.mxu0 0
    %649 = vmatprep.subr.bf16.mxu0 0
    %650 = vmatpush2.bf16.msra.mxu0 0
    %651 = vmatprep.subr.bf16.mxu0 0
    %652 = vmatpush2.bf16.msra.mxu0 0
    %653 = vmatprep.subr.bf16.mxu0 0
    %654 = vmatpush2.bf16.msra.mxu0 0
    %655 = vmatprep.subr.bf16.mxu0 0
    %656 = vmatpush2.bf16.msra.mxu0 0
    %657 = vmatprep.subr.bf16.mxu0 0
    %658 = vmatpush2.bf16.msra.mxu0 0
    %659 = vmatprep.subr.bf16.mxu0 0
    %660 = vmatpush2.bf16.msra.mxu0 0
    %661 = vmatprep.subr.bf16.mxu0 0
    %662 = vmatpush2.bf16.msra.mxu0 0
    %663 = vmatprep.mubr.bf16.mxu0 0
    %664 = vmatmul.mubr.bf16.gmra.mxu0 %v629
    %v665 = vpop.f32.mrf.mxu0
    %v666 = vadd.f32 0.0, %v665
    %v667 = vpop.f32.mrf.mxu0
    %v668 = vpop.f32.mrf.mxu0
    %v669 = vpop.f32.mrf.mxu0
    %670 = vdwg.mxu0
    %v672 = vsel %vm114, %v626, 0
    %674 = vmatprep.subr.bf16.mxu0 0
    %675 = vmatpush1.bf16.msra.mxu0 0
    %676 = vmatprep.subr.bf16.mxu0 0
    %677 = vmatpush1.bf16.msra.mxu0 0
    %678 = vmatprep.subr.bf16.mxu0 0
    %679 = vmatpush1.bf16.msra.mxu0 0
    %680 = vmatprep.subr.bf16.mxu0 0
    %681 = vmatpush1.bf16.msra.mxu0 0
    %682 = vmatprep.subr.bf16.mxu0 0
    %683 = vmatpush1.bf16.msra.mxu0 0
    %684 = vmatprep.subr.bf16.mxu0 0
    %685 = vmatpush1.bf16.msra.mxu0 0
    %686 = vmatprep.subr.bf16.mxu0 0
    %687 = vmatpush1.bf16.msra.mxu0 0
    %688 = vmatprep.subr.bf16.mxu0 0
    %689 = vmatpush1.bf16.msra.mxu0 %v112
    %690 = vmatprep.subr.bf16.mxu0 0
    %691 = vmatpush2.bf16.msra.mxu0 0
    %692 = vmatprep.subr.bf16.mxu0 0
    %693 = vmatpush2.bf16.msra.mxu0 0
    %694 = vmatprep.subr.bf16.mxu0 0
    %695 = vmatpush2.bf16.msra.mxu0 0
    %696 = vmatprep.subr.bf16.mxu0 0
    %697 = vmatpush2.bf16.msra.mxu0 0
    %698 = vmatprep.subr.bf16.mxu0 0
    %699 = vmatpush2.bf16.msra.mxu0 0
    %700 = vmatprep.subr.bf16.mxu0 0
    %701 = vmatpush2.bf16.msra.mxu0 0
    %702 = vmatprep.subr.bf16.mxu0 0
    %703 = vmatpush2.bf16.msra.mxu0 0
    %704 = vmatprep.subr.bf16.mxu0 0
    %705 = vmatpush2.bf16.msra.mxu0 0
    %706 = vmatprep.mubr.bf16.mxu0 0
    %707 = vmatmul.mubr.bf16.gmra.mxu0 %v672
    %v708 = vpop.f32.mrf.mxu0
    %v709 = vadd.f32 %v666, %v708
    %v710 = vpop.f32.mrf.mxu0
    %v711 = vpop.f32.mrf.mxu0
    %v712 = vpop.f32.mrf.mxu0
    %713 = vdwg.mxu0
    %v714 = vadd.f32 %v709, %v162
    %v715 = vxor.u32 %v714, 2147483648
    %v716 = vmul.f32 %v715, 1.442695
    %v717 = vpow.pop %v716
    %v718 = vadd.f32 %v717, 1.0
    %v719 = vrcp.pop %v718
    %v720 = vmul.f32 1.0, %v719
    %v721 = vtanh.pop %v714
    %723 = vrot.lane.b32.xlu0 %v622, 32
    %v724 = vpop.permute.xlu0 %723
    %v726 = vmul.f32 %v720, %v724
    %728 = vrot.lane.b32.xlu0 %v721, 32
    %v729 = vpop.permute.xlu0 %728
    %v731 = vmul.f32 %v720, %v729
    %733 = vrot.lane.b32.xlu0 %v731, 32
    %v734 = vpop.permute.xlu0 %733
    %v736 = vadd.f32 %v726, %v734
    %v737 = vtanh.pop %v736
    %739 = vrot.lane.b32.xlu0 %v737, 32
    %v740 = vpop.permute.xlu0 %739
    %v742 = vmul.f32 %v720, %v740
    %s743 = scalar_lea.vmem %s1, 32
    %v744 = vld [vmem:[%s743] sm:$0xff]
    %vm745 = vcmp.gt.f32.partialorder %v744, 0.5
    %v746 = vsel %vm745, 1, 0
    %747 = vset.pattern.permute.xlu0 0
    %748 = vperm.xlu0 %747, %v746
    %v749 = vpop.permute.xlu0 %748
    %vm750 = vcmp.eq.s32.totalorder %v749, 1
    %752 = vrot.lane.b32.xlu0 %v742, 64
    %v753 = vpop.permute.xlu0 %752
    %v755 = vsel %vm750, %v617, %v753
    %757 = vrot.lane.b32.xlu0 %v736, 96
    %v758 = vpop.permute.xlu0 %757
    %v760 = vsel %vm750, %v622, %v758
    %s761 = scalar_lea.vmem [#allocation2], 32
    %762 = vst.msk [vmem:[%s761] sm:$0xff] %vm64, %v755
    %s763 = scalar_lea.vmem %s0, 20
    %v764 = vld [vmem:[%s763] sm:$0xf]
    %v765 = vpack.c.bf16 %v755, %v755
    %v767 = vsel %vm64, %v765, 0
    %769 = vmatprep.subr.bf16.mxu0 0
    %770 = vmatpush1.bf16.msra.mxu0 0
    %771 = vmatprep.subr.bf16.mxu0 0
    %772 = vmatpush1.bf16.msra.mxu0 0
    %773 = vmatprep.subr.bf16.mxu0 0
    %774 = vmatpush1.bf16.msra.mxu0 0
    %775 = vmatprep.subr.bf16.mxu0 0
    %776 = vmatpush1.bf16.msra.mxu0 0
    %777 = vmatprep.subr.bf16.mxu0 0
    %778 = vmatpush1.bf16.msra.mxu0 0
    %779 = vmatprep.subr.bf16.mxu0 0
    %780 = vmatpush1.bf16.msra.mxu0 0
    %781 = vmatprep.subr.bf16.mxu0 0
    %782 = vmatpush1.bf16.msra.mxu0 %v61
    %783 = vmatprep.subr.bf16.mxu0 0
    %784 = vmatpush1.bf16.msra.mxu0 %v60
    %785 = vmatprep.subr.bf16.mxu0 0
    %786 = vmatpush2.bf16.msra.mxu0 0
    %787 = vmatprep.subr.bf16.mxu0 0
    %788 = vmatpush2.bf16.msra.mxu0 0
    %789 = vmatprep.subr.bf16.mxu0 0
    %790 = vmatpush2.bf16.msra.mxu0 0
    %791 = vmatprep.subr.bf16.mxu0 0
    %792 = vmatpush2.bf16.msra.mxu0 0
    %793 = vmatprep.subr.bf16.mxu0 0
    %794 = vmatpush2.bf16.msra.mxu0 0
    %795 = vmatprep.subr.bf16.mxu0 0
    %796 = vmatpush2.bf16.msra.mxu0 0
    %797 = vmatprep.subr.bf16.mxu0 0
    %798 = vmatpush2.bf16.msra.mxu0 0
    %799 = vmatprep.subr.bf16.mxu0 0
    %800 = vmatpush2.bf16.msra.mxu0 0
    %801 = vmatprep.mubr.bf16.mxu0 0
    %802 = vmatmul.mubr.bf16.gmra.mxu0 %v767
    %v803 = vpop.f32.mrf.mxu0
    %v804 = vadd.f32 0.0, %v803
    %v805 = vpop.f32.mrf.mxu0
    %v806 = vpop.f32.mrf.mxu0
    %v807 = vpop.f32.mrf.mxu0
    %808 = vdwg.mxu0
    %v810 = vsel %vm114, %v764, 0
    %812 = vmatprep.subr.bf16.mxu0 0
    %813 = vmatpush1.bf16.msra.mxu0 0
    %814 = vmatprep.subr.bf16.mxu0 0
    %815 = vmatpush1.bf16.msra.mxu0 0
    %816 = vmatprep.subr.bf16.mxu0 0
    %817 = vmatpush1.bf16.msra.mxu0 0
    %818 = vmatprep.subr.bf16.mxu0 0
    %819 = vmatpush1.bf16.msra.mxu0 0
    %820 = vmatprep.subr.bf16.mxu0 0
    %821 = vmatpush1.bf16.msra.mxu0 0
    %822 = vmatprep.subr.bf16.mxu0 0
    %823 = vmatpush1.bf16.msra.mxu0 0
    %824 = vmatprep.subr.bf16.mxu0 0
    %825 = vmatpush1.bf16.msra.mxu0 0
    %826 = vmatprep.subr.bf16.mxu0 0
    %827 = vmatpush1.bf16.msra.mxu0 %v112
    %828 = vmatprep.subr.bf16.mxu0 0
    %829 = vmatpush2.bf16.msra.mxu0 0
    %830 = vmatprep.subr.bf16.mxu0 0
    %831 = vmatpush2.bf16.msra.mxu0 0
    %832 = vmatprep.subr.bf16.mxu0 0
    %833 = vmatpush2.bf16.msra.mxu0 0
    %834 = vmatprep.subr.bf16.mxu0 0
    %835 = vmatpush2.bf16.msra.mxu0 0
    %836 = vmatprep.subr.bf16.mxu0 0
    %837 = vmatpush2.bf16.msra.mxu0 0
    %838 = vmatprep.subr.bf16.mxu0 0
    %839 = vmatpush2.bf16.msra.mxu0 0
    %840 = vmatprep.subr.bf16.mxu0 0
    %841 = vmatpush2.bf16.msra.mxu0 0
    %842 = vmatprep.subr.bf16.mxu0 0
    %843 = vmatpush2.bf16.msra.mxu0 0
    %844 = vmatprep.mubr.bf16.mxu0 0
    %845 = vmatmul.mubr.bf16.gmra.mxu0 %v810
    %v846 = vpop.f32.mrf.mxu0
    %v847 = vadd.f32 %v804, %v846
    %v848 = vpop.f32.mrf.mxu0
    %v849 = vpop.f32.mrf.mxu0
    %v850 = vpop.f32.mrf.mxu0
    %851 = vdwg.mxu0
    %v852 = vadd.f32 %v847, %v162
    %v853 = vxor.u32 %v852, 2147483648
    %v854 = vmul.f32 %v853, 1.442695
    %v855 = vpow.pop %v854
    %v856 = vadd.f32 %v855, 1.0
    %v857 = vrcp.pop %v856
    %v858 = vmul.f32 1.0, %v857
    %v859 = vtanh.pop %v852
    %861 = vrot.lane.b32.xlu0 %v760, 32
    %v862 = vpop.permute.xlu0 %861
    %v864 = vmul.f32 %v858, %v862
    %866 = vrot.lane.b32.xlu0 %v859, 32
    %v867 = vpop.permute.xlu0 %866
    %v869 = vmul.f32 %v858, %v867
    %871 = vrot.lane.b32.xlu0 %v869, 32
    %v872 = vpop.permute.xlu0 %871
    %v874 = vadd.f32 %v864, %v872
    %v875 = vtanh.pop %v874
    %877 = vrot.lane.b32.xlu0 %v875, 32
    %v878 = vpop.permute.xlu0 %877
    %v880 = vmul.f32 %v858, %v878
    %s881 = scalar_lea.vmem %s1, 40
    %v882 = vld [vmem:[%s881] sm:$0xff]
    %vm883 = vcmp.gt.f32.partialorder %v882, 0.5
    %v884 = vsel %vm883, 1, 0
    %885 = vset.pattern.permute.xlu0 0
    %886 = vperm.xlu0 %885, %v884
    %v887 = vpop.permute.xlu0 %886
    %vm888 = vcmp.eq.s32.totalorder %v887, 1
    %890 = vrot.lane.b32.xlu0 %v880, 64
    %v891 = vpop.permute.xlu0 %890
    %v893 = vsel %vm888, %v755, %v891
    %895 = vrot.lane.b32.xlu0 %v874, 96
    %v896 = vpop.permute.xlu0 %895
    %v898 = vsel %vm888, %v760, %v896
    %s899 = scalar_lea.vmem [#allocation2], 40
    %900 = vst.msk [vmem:[%s899] sm:$0xff] %vm64, %v893
    %s901 = scalar_lea.vmem %s0, 24
    %v902 = vld [vmem:[%s901] sm:$0xf]
    %v903 = vpack.c.bf16 %v893, %v893
    %v905 = vsel %vm64, %v903, 0
    %907 = vmatprep.subr.bf16.mxu0 0
    %908 = vmatpush1.bf16.msra.mxu0 0
    %909 = vmatprep.subr.bf16.mxu0 0
    %910 = vmatpush1.bf16.msra.mxu0 0
    %911 = vmatprep.subr.bf16.mxu0 0
    %912 = vmatpush1.bf16.msra.mxu0 0
    %913 = vmatprep.subr.bf16.mxu0 0
    %914 = vmatpush1.bf16.msra.mxu0 0
    %915 = vmatprep.subr.bf16.mxu0 0
    %916 = vmatpush1.bf16.msra.mxu0 0
    %917 = vmatprep.subr.bf16.mxu0 0
    %918 = vmatpush1.bf16.msra.mxu0 0
    %919 = vmatprep.subr.bf16.mxu0 0
    %920 = vmatpush1.bf16.msra.mxu0 %v61
    %921 = vmatprep.subr.bf16.mxu0 0
    %922 = vmatpush1.bf16.msra.mxu0 %v60
    %923 = vmatprep.subr.bf16.mxu0 0
    %924 = vmatpush2.bf16.msra.mxu0 0
    %925 = vmatprep.subr.bf16.mxu0 0
    %926 = vmatpush2.bf16.msra.mxu0 0
    %927 = vmatprep.subr.bf16.mxu0 0
    %928 = vmatpush2.bf16.msra.mxu0 0
    %929 = vmatprep.subr.bf16.mxu0 0
    %930 = vmatpush2.bf16.msra.mxu0 0
    %931 = vmatprep.subr.bf16.mxu0 0
    %932 = vmatpush2.bf16.msra.mxu0 0
    %933 = vmatprep.subr.bf16.mxu0 0
    %934 = vmatpush2.bf16.msra.mxu0 0
    %935 = vmatprep.subr.bf16.mxu0 0
    %936 = vmatpush2.bf16.msra.mxu0 0
    %937 = vmatprep.subr.bf16.mxu0 0
    %938 = vmatpush2.bf16.msra.mxu0 0
    %939 = vmatprep.mubr.bf16.mxu0 0
    %940 = vmatmul.mubr.bf16.gmra.mxu0 %v905
    %v941 = vpop.f32.mrf.mxu0
    %v942 = vadd.f32 0.0, %v941
    %v943 = vpop.f32.mrf.mxu0
    %v944 = vpop.f32.mrf.mxu0
    %v945 = vpop.f32.mrf.mxu0
    %946 = vdwg.mxu0
    %v948 = vsel %vm114, %v902, 0
    %950 = vmatprep.subr.bf16.mxu0 0
    %951 = vmatpush1.bf16.msra.mxu0 0
    %952 = vmatprep.subr.bf16.mxu0 0
    %953 = vmatpush1.bf16.msra.mxu0 0
    %954 = vmatprep.subr.bf16.mxu0 0
    %955 = vmatpush1.bf16.msra.mxu0 0
    %956 = vmatprep.subr.bf16.mxu0 0
    %957 = vmatpush1.bf16.msra.mxu0 0
    %958 = vmatprep.subr.bf16.mxu0 0
    %959 = vmatpush1.bf16.msra.mxu0 0
    %960 = vmatprep.subr.bf16.mxu0 0
    %961 = vmatpush1.bf16.msra.mxu0 0
    %962 = vmatprep.subr.bf16.mxu0 0
    %963 = vmatpush1.bf16.msra.mxu0 0
    %964 = vmatprep.subr.bf16.mxu0 0
    %965 = vmatpush1.bf16.msra.mxu0 %v112
    %966 = vmatprep.subr.bf16.mxu0 0
    %967 = vmatpush2.bf16.msra.mxu0 0
    %968 = vmatprep.subr.bf16.mxu0 0
    %969 = vmatpush2.bf16.msra.mxu0 0
    %970 = vmatprep.subr.bf16.mxu0 0
    %971 = vmatpush2.bf16.msra.mxu0 0
    %972 = vmatprep.subr.bf16.mxu0 0
    %973 = vmatpush2.bf16.msra.mxu0 0
    %974 = vmatprep.subr.bf16.mxu0 0
    %975 = vmatpush2.bf16.msra.mxu0 0
    %976 = vmatprep.subr.bf16.mxu0 0
    %977 = vmatpush2.bf16.msra.mxu0 0
    %978 = vmatprep.subr.bf16.mxu0 0
    %979 = vmatpush2.bf16.msra.mxu0 0
    %980 = vmatprep.subr.bf16.mxu0 0
    %981 = vmatpush2.bf16.msra.mxu0 0
    %982 = vmatprep.mubr.bf16.mxu0 0
    %983 = vmatmul.mubr.bf16.gmra.mxu0 %v948
    %v984 = vpop.f32.mrf.mxu0
    %v985 = vadd.f32 %v942, %v984
    %v986 = vpop.f32.mrf.mxu0
    %v987 = vpop.f32.mrf.mxu0
    %v988 = vpop.f32.mrf.mxu0
    %989 = vdwg.mxu0
    %v990 = vadd.f32 %v985, %v162
    %v991 = vxor.u32 %v990, 2147483648
    %v992 = vmul.f32 %v991, 1.442695
    %v993 = vpow.pop %v992
    %v994 = vadd.f32 %v993, 1.0
    %v995 = vrcp.pop %v994
    %v996 = vmul.f32 1.0, %v995
    %v997 = vtanh.pop %v990
    %999 = vrot.lane.b32.xlu0 %v898, 32
    %v1000 = vpop.permute.xlu0 %999
    %v1002 = vmul.f32 %v996, %v1000
    %1004 = vrot.lane.b32.xlu0 %v997, 32
    %v1005 = vpop.permute.xlu0 %1004
    %v1007 = vmul.f32 %v996, %v1005
    %1009 = vrot.lane.b32.xlu0 %v1007, 32
    %v1010 = vpop.permute.xlu0 %1009
    %v1012 = vadd.f32 %v1002, %v1010
    %v1013 = vtanh.pop %v1012
    %1015 = vrot.lane.b32.xlu0 %v1013, 32
    %v1016 = vpop.permute.xlu0 %1015
    %v1018 = vmul.f32 %v996, %v1016
    %s1019 = scalar_lea.vmem %s1, 48
    %v1020 = vld [vmem:[%s1019] sm:$0xff]
    %vm1021 = vcmp.gt.f32.partialorder %v1020, 0.5
    %v1022 = vsel %vm1021, 1, 0
    %1023 = vset.pattern.permute.xlu0 0
    %1024 = vperm.xlu0 %1023, %v1022
    %v1025 = vpop.permute.xlu0 %1024
    %vm1026 = vcmp.eq.s32.totalorder %v1025, 1
    %1028 = vrot.lane.b32.xlu0 %v1018, 64
    %v1029 = vpop.permute.xlu0 %1028
    %v1031 = vsel %vm1026, %v893, %v1029
    %1033 = vrot.lane.b32.xlu0 %v1012, 96
    %v1034 = vpop.permute.xlu0 %1033
    %v1036 = vsel %vm1026, %v898, %v1034
    %s1037 = scalar_lea.vmem [#allocation2], 48
    %1038 = vst.msk [vmem:[%s1037] sm:$0xff] %vm64, %v1031
    %s1039 = scalar_lea.vmem %s0, 28
    %v1040 = vld [vmem:[%s1039] sm:$0xf]
    %v1041 = vpack.c.bf16 %v1031, %v1031
    %v1043 = vsel %vm64, %v1041, 0
    %1045 = vmatprep.subr.bf16.mxu0 0
    %1046 = vmatpush1.bf16.msra.mxu0 0
    %1047 = vmatprep.subr.bf16.mxu0 0
    %1048 = vmatpush1.bf16.msra.mxu0 0
    %1049 = vmatprep.subr.bf16.mxu0 0
    %1050 = vmatpush1.bf16.msra.mxu0 0
    %1051 = vmatprep.subr.bf16.mxu0 0
    %1052 = vmatpush1.bf16.msra.mxu0 0
    %1053 = vmatprep.subr.bf16.mxu0 0
    %1054 = vmatpush1.bf16.msra.mxu0 0
    %1055 = vmatprep.subr.bf16.mxu0 0
    %1056 = vmatpush1.bf16.msra.mxu0 0
    %1057 = vmatprep.subr.bf16.mxu0 0
    %1058 = vmatpush1.bf16.msra.mxu0 %v61
    %1059 = vmatprep.subr.bf16.mxu0 0
    %1060 = vmatpush1.bf16.msra.mxu0 %v60
    %1061 = vmatprep.subr.bf16.mxu0 0
    %1062 = vmatpush2.bf16.msra.mxu0 0
    %1063 = vmatprep.subr.bf16.mxu0 0
    %1064 = vmatpush2.bf16.msra.mxu0 0
    %1065 = vmatprep.subr.bf16.mxu0 0
    %1066 = vmatpush2.bf16.msra.mxu0 0
    %1067 = vmatprep.subr.bf16.mxu0 0
    %1068 = vmatpush2.bf16.msra.mxu0 0
    %1069 = vmatprep.subr.bf16.mxu0 0
    %1070 = vmatpush2.bf16.msra.mxu0 0
    %1071 = vmatprep.subr.bf16.mxu0 0
    %1072 = vmatpush2.bf16.msra.mxu0 0
    %1073 = vmatprep.subr.bf16.mxu0 0
    %1074 = vmatpush2.bf16.msra.mxu0 0
    %1075 = vmatprep.subr.bf16.mxu0 0
    %1076 = vmatpush2.bf16.msra.mxu0 0
    %1077 = vmatprep.mubr.bf16.mxu0 0
    %1078 = vmatmul.mubr.bf16.gmra.mxu0 %v1043
    %v1079 = vpop.f32.mrf.mxu0
    %v1080 = vadd.f32 0.0, %v1079
    %v1081 = vpop.f32.mrf.mxu0
    %v1082 = vpop.f32.mrf.mxu0
    %v1083 = vpop.f32.mrf.mxu0
    %1084 = vdwg.mxu0
    %v1086 = vsel %vm114, %v1040, 0
    %1088 = vmatprep.subr.bf16.mxu0 0
    %1089 = vmatpush1.bf16.msra.mxu0 0
    %1090 = vmatprep.subr.bf16.mxu0 0
    %1091 = vmatpush1.bf16.msra.mxu0 0
    %1092 = vmatprep.subr.bf16.mxu0 0
    %1093 = vmatpush1.bf16.msra.mxu0 0
    %1094 = vmatprep.subr.bf16.mxu0 0
    %1095 = vmatpush1.bf16.msra.mxu0 0
    %1096 = vmatprep.subr.bf16.mxu0 0
    %1097 = vmatpush1.bf16.msra.mxu0 0
    %1098 = vmatprep.subr.bf16.mxu0 0
    %1099 = vmatpush1.bf16.msra.mxu0 0
    %1100 = vmatprep.subr.bf16.mxu0 0
    %1101 = vmatpush1.bf16.msra.mxu0 0
    %1102 = vmatprep.subr.bf16.mxu0 0
    %1103 = vmatpush1.bf16.msra.mxu0 %v112
    %1104 = vmatprep.subr.bf16.mxu0 0
    %1105 = vmatpush2.bf16.msra.mxu0 0
    %1106 = vmatprep.subr.bf16.mxu0 0
    %1107 = vmatpush2.bf16.msra.mxu0 0
    %1108 = vmatprep.subr.bf16.mxu0 0
    %1109 = vmatpush2.bf16.msra.mxu0 0
    %1110 = vmatprep.subr.bf16.mxu0 0
    %1111 = vmatpush2.bf16.msra.mxu0 0
    %1112 = vmatprep.subr.bf16.mxu0 0
    %1113 = vmatpush2.bf16.msra.mxu0 0
    %1114 = vmatprep.subr.bf16.mxu0 0
    %1115 = vmatpush2.bf16.msra.mxu0 0
    %1116 = vmatprep.subr.bf16.mxu0 0
    %1117 = vmatpush2.bf16.msra.mxu0 0
    %1118 = vmatprep.subr.bf16.mxu0 0
    %1119 = vmatpush2.bf16.msra.mxu0 0
    %1120 = vmatprep.mubr.bf16.mxu0 0
    %1121 = vmatmul.mubr.bf16.gmra.mxu0 %v1086
    %v1122 = vpop.f32.mrf.mxu0
    %v1123 = vadd.f32 %v1080, %v1122
    %v1124 = vpop.f32.mrf.mxu0
    %v1125 = vpop.f32.mrf.mxu0
    %v1126 = vpop.f32.mrf.mxu0
    %1127 = vdwg.mxu0
    %v1128 = vadd.f32 %v1123, %v162
    %v1129 = vxor.u32 %v1128, 2147483648
    %v1130 = vmul.f32 %v1129, 1.442695
    %v1131 = vpow.pop %v1130
    %v1132 = vadd.f32 %v1131, 1.0
    %v1133 = vrcp.pop %v1132
    %v1134 = vmul.f32 1.0, %v1133
    %v1135 = vtanh.pop %v1128
    %1137 = vrot.lane.b32.xlu0 %v1036, 32
    %v1138 = vpop.permute.xlu0 %1137
    %v1140 = vmul.f32 %v1134, %v1138
    %1142 = vrot.lane.b32.xlu0 %v1135, 32
    %v1143 = vpop.permute.xlu0 %1142
    %v1145 = vmul.f32 %v1134, %v1143
    %1147 = vrot.lane.b32.xlu0 %v1145, 32
    %v1148 = vpop.permute.xlu0 %1147
    %v1150 = vadd.f32 %v1140, %v1148
    %v1151 = vtanh.pop %v1150
    %1153 = vrot.lane.b32.xlu0 %v1151, 32
    %v1154 = vpop.permute.xlu0 %1153
    %v1156 = vmul.f32 %v1134, %v1154
    %s1157 = scalar_lea.vmem %s1, 56
    %v1158 = vld [vmem:[%s1157] sm:$0xff]
    %vm1159 = vcmp.gt.f32.partialorder %v1158, 0.5
    %v1160 = vsel %vm1159, 1, 0
    %1161 = vset.pattern.permute.xlu0 0
    %1162 = vperm.xlu0 %1161, %v1160
    %v1163 = vpop.permute.xlu0 %1162
    %vm1164 = vcmp.eq.s32.totalorder %v1163, 1
    %1166 = vrot.lane.b32.xlu0 %v1156, 64
    %v1167 = vpop.permute.xlu0 %1166
    %v1169 = vsel %vm1164, %v1031, %v1167
    %1171 = vrot.lane.b32.xlu0 %v1150, 96
    %v1172 = vpop.permute.xlu0 %1171
    %v1174 = vsel %vm1164, %v1036, %v1172
    %s1175 = scalar_lea.vmem [#allocation2], 56
    %1176 = vst.msk [vmem:[%s1175] sm:$0xff] %vm64, %v1169
    %1177 = vst.msk [vmem:[#allocation4] sm:$0xff] %vm64, %v1169
    %1178 = vst.msk [vmem:[#allocation6] sm:$0xff] %vm64, %v1174
    // Predicated region
    $region34: #{tpu_custom_call.1} parent=1 // pred_check
      _
    $region35: #{tpu_custom_call.1} parent=1 // pred_check_branch
      %1180 = sbr.rel (0) target = $region37
    $region36: #{tpu_custom_call.1} parent=1 // pred_region
      %s1182 = ssub.s32 1024, 1024
      %1183 = vsyncadd [#allocation3], %s1182
      %s1184 = sshll.u32 [#allocation2], 4
      %s1185 = int_to_ptr.vmem [resolvable:$true] %s1184
      %1190 = dma.vmem_to_hbm [thread:$0]  %s1185, 1024, %s7, [#allocation3], 128, 128, 8
    $region37: #{tpu_custom_call.1} parent=1 // pred_fallthru
      _
    // Predicated region
    $region38: #{tpu_custom_call.1} parent=1 // pred_check
      _
    $region39: #{tpu_custom_call.1} parent=1 // pred_check_branch
      %1192 = sbr.rel (0) target = $region41
    $region40: #{tpu_custom_call.1} parent=1 // pred_region
      %s1194 = ssub.s32 128, 128
      %1195 = vsyncadd [#allocation5], %s1194
      %s1197 = sshll.u32 [#allocation4], 4
      %s1198 = int_to_ptr.vmem [resolvable:$true] %s1197
      %1200 = dma.vmem_to_hbm [thread:$0]  %s1198, 128, %s8, [#allocation5]
    $region41: #{tpu_custom_call.1} parent=1 // pred_fallthru
      _
    // Predicated region
    $region42: #{tpu_custom_call.1} parent=1 // pred_check
      _
    $region43: #{tpu_custom_call.1} parent=1 // pred_check_branch
      %1202 = sbr.rel (0) target = $region45
    $region44: #{tpu_custom_call.1} parent=1 // pred_region
      %s1204 = ssub.s32 128, 128
      %1205 = vsyncadd [#allocation5], %s1204
      %s1207 = sshll.u32 [#allocation6], 4
      %s1208 = int_to_ptr.vmem [resolvable:$true] %s1207
      %1210 = dma.vmem_to_hbm [thread:$0]  %s1208, 128, %s9, [#allocation5]
    $region45: #{tpu_custom_call.1} parent=1 // pred_fallthru
      _
    // Predicated region
    $region46: #{tpu_custom_call.1} parent=1 // pred_check
      _
    $region47: #{tpu_custom_call.1} parent=1 // pred_check_branch
      %1212 = sbr.rel (0) target = $region49
    $region48: #{tpu_custom_call.1} parent=1 // pred_region
      %1213 = dma.done [#allocation3], 1024
    $region49: #{tpu_custom_call.1} parent=1 // pred_fallthru
      _
    // Predicated region
    $region50: #{tpu_custom_call.1} parent=1 // pred_check
      _
    $region51: #{tpu_custom_call.1} parent=1 // pred_check_branch
      %1215 = sbr.rel (0) target = $region53
    $region52: #{tpu_custom_call.1} parent=1 // pred_region
      %1216 = dma.done [#allocation5], 128
    $region53: #{tpu_custom_call.1} parent=1 // pred_fallthru
      _
    // Predicated region
    $region54: #{tpu_custom_call.1} parent=1 // pred_check
      _
    $region55: #{tpu_custom_call.1} parent=1 // pred_check_branch
      %1218 = sbr.rel (0) target = $region57
    $region56: #{tpu_custom_call.1} parent=1 // pred_region
      %1219 = dma.done [#allocation5], 128
    $region57: #{tpu_custom_call.1} parent=1 // pred_fallthru
      _
    %1220 = vsyncpa [#allocation3], 1
    %1221 = vsyncpa [#allocation5], 1

</llo_original>
